<compile_context>
chip_gen: v7x
topology: tpu7x:2x2x1
jax: 0.10.0
libtpu: 0.0.40
codegen_flags: <defaults>
</compile_context>

<pallas_src>
import functools
import math

import jax
import jax.numpy as jnp
from jax.experimental import pallas as pl
from jax.experimental.pallas import tpu as pltpu

BN_EPS = 1e-3  # BN_EPS_TF_DEFAULT


# ----------------------------------------------------------------------------
# Tiling / compiler-param helpers
# ----------------------------------------------------------------------------
_ROW_TILES = (512, 256, 128, 64, 32, 16, 8)
_K_TILES = (1536, 1280, 1024, 768, 640, 512)      # multiples of 128 (lane constraint)
_N_TILES = (1536, 1280, 1024, 768, 640, 512)      # multiples of 128 (lane constraint)


@functools.lru_cache(maxsize=None)
def _vmem_limit_bytes():
    try:
        cap = int(pltpu.get_tpu_info().vmem_capacity_bytes)
    except Exception:
        cap = 128 * 1024 * 1024
    if cap >= 128 * 1024 * 1024:
        return 100 * 1024 * 1024                     # v5e / v6e: use most of the 128 MiB
    return min(cap * 3 // 4, 48 * 1024 * 1024)       # v7x: 64 MiB physical -> keep headroom


def _cparams(semantics):
    return pltpu.CompilerParams(dimension_semantics=semantics,
                                vmem_limit_bytes=_vmem_limit_bytes())


def _pick_div(dim, candidates):
    """Largest candidate that evenly divides dim; else the full dim (block == array dim)."""
    for c in candidates:
        if c <= dim and dim % c == 0:
            return c
    return dim


def _row_tile(hw, nb):
    """Row (HW) tile: multiple of 8 (or full dim); cdiv grid clips the tail block."""
    if hw > 512:
        return 512
    if nb == 1 and hw >= 16:
        # keep >= 2 row blocks so the grid can shard across v7x's two TensorCores
        return ((((hw + 1) // 2) + 7) // 8) * 8
    return hw


def _pick_k_tile(k):
    if k <= 2048:
        return k
    return _pick_div(k, _K_TILES)


def _pick_n_tile(n):
    if n <= 2048:
        return n
    return _pick_div(n, _N_TILES)


def _pick_channel_tile(c, hw_padded, bytes_per_elem=2, budget_bytes=8 * 1024 * 1024):
    """Channel tile for the depthwise kernel: lane-aligned (x128) or the full dim."""
    if hw_padded * c * bytes_per_elem <= budget_bytes:
        return c
    best = c
    for cand in (1024, 896, 768, 640, 512, 384, 256, 128):
        if c % cand == 0:
            best = cand
            if hw_padded * cand * bytes_per_elem <= budget_bytes:
                return cand
    # TODO(synk): spatial (row-block + halo) tiling needed for very large padded maps.
    return best


# ----------------------------------------------------------------------------
# Fused pointwise-conv / FC kernel:
#   out = act((x * scale?) @ W + b) + residual?
# grid = (batch, row_tiles, Cout_tiles, K_tiles), K innermost (reduction, "arbitrary")
# bf16 MXU operands, f32 accumulation; accumulator scratch only when K is tiled.
# ----------------------------------------------------------------------------
def _pw_kernel(*refs, act, has_scale, has_res, nk, use_acc):
    it = iter(refs)
    x_ref = next(it)
    s_ref = next(it) if has_scale else None
    w_ref = next(it)
    b_ref = next(it)
    r_ref = next(it) if has_res else None
    o_ref = next(it)
    acc_ref = next(it) if use_acc else None

    xv = x_ref[...]
    if has_scale:
        xv = (xv.astype(jnp.float32) * s_ref[...]).astype(jnp.bfloat16)   # SE channel gate
    else:
        xv = xv.astype(jnp.bfloat16)
    part = jnp.dot(xv, w_ref[...], preferred_element_type=jnp.float32)

    def _finalize(acc):
        out = acc + b_ref[...]
        if act == "swish":
            out = out * jax.nn.sigmoid(out)
        elif act == "sigmoid":
            out = jax.nn.sigmoid(out)
        if has_res:
            out = out + r_ref[...].astype(jnp.float32)
        o_ref[...] = out.astype(o_ref.dtype)

    if not use_acc:
        _finalize(part)
    else:
        kk = pl.program_id(3)

        @pl.when(kk == 0)
        def _():
            acc_ref[...] = jnp.zeros_like(acc_ref)

        acc_ref[...] += part

        @pl.when(kk == nk - 1)
        def _():
            _finalize(acc_ref[...])


def fused_pw_conv(x, w, b, act="none", scale=None, residual=None, out_dtype=jnp.bfloat16):
    """x: (Nb, HW, K); w: (K, Cout) bf16; b: (Cout,) f32.
       scale: optional (Nb, K) per-sample channel gate (SE), applied to x before the matmul.
       residual: optional (Nb, HW, Cout) added after bias (act must be 'none')."""
    nb, hw, kdim = x.shape
    cout = w.shape[1]
    if residual is not None:
        assert act == "none", "residual add assumes a linear (act-free) epilogue"
    thw = _row_tile(hw, nb)
    tk = _pick_k_tile(kdim)
    tn = _pick_n_tile(cout)
    nm, nn, nk = pl.cdiv(hw, thw), cout // tn, kdim // tk
    use_acc = nk > 1
    has_scale = scale is not None
    has_res = residual is not None

    in_specs = [pl.BlockSpec((None, thw, tk), lambda bb, i, j, k: (bb, i, k))]
    args = [x]
    if has_scale:
        in_specs.append(pl.BlockSpec((None, 1, tk), lambda bb, i, j, k: (bb, 0, k)))
        args.append(scale.reshape(nb, 1, kdim))
    in_specs.append(pl.BlockSpec((tk, tn), lambda bb, i, j, k: (k, j)))
    args.append(w)
    in_specs.append(pl.BlockSpec((1, tn), lambda bb, i, j, k: (0, j)))
    args.append(b.reshape(1, cout))
    if has_res:
        in_specs.append(pl.BlockSpec((None, thw, tn), lambda bb, i, j, k: (bb, i, j)))
        args.append(residual)

    kernel = functools.partial(_pw_kernel, act=act, has_scale=has_scale,
                               has_res=has_res, nk=nk, use_acc=use_acc)
    return pl.pallas_call(
        kernel,
        out_shape=jax.ShapeDtypeStruct((nb, hw, cout), out_dtype),
        grid=(nb, nm, nn, nk),
        in_specs=in_specs,
        out_specs=pl.BlockSpec((None, thw, tn), lambda bb, i, j, k: (bb, i, j)),
        scratch_shapes=[pltpu.VMEM((thw, tn), jnp.float32)] if use_acc else [],
        compiler_params=_cparams(("parallel", "parallel", "parallel", "arbitrary")),
    )(*args)


# ----------------------------------------------------------------------------
# Depthwise conv, stride 1: read the padded map once, hoist the k horizontal (sublane)
# shifts, slice rows inside VMEM, and emit the SE channel-sum as a fused second output.
# ----------------------------------------------------------------------------
def _tree_sum(vals):
    while len(vals) > 1:
        nxt = [vals[i] + vals[i + 1] for i in range(0, len(vals) - 1, 2)]
        if len(vals) % 2:
            nxt.append(vals[-1])
        vals = nxt
    return vals[0]


def _dw_s1_kernel(x_ref, w_ref, b_ref, o_ref, sum_ref, *, k, oh, ow, act):
    xv = x_ref[...].astype(jnp.float32)            # (H_pad, W_pad, tc)
    wv = w_ref[...]                                # (k*k, tc) f32
    # hoist the k horizontal (sublane-axis) shifts once; row (outer-dim) slices are cheap
    cols = [xv[:, kx:kx + ow, :] for kx in range(k)]
    taps = []
    for ky in range(k):
        for kx in range(k):
            taps.append(cols[kx][ky:ky + oh] * wv[ky * k + kx])
    out = _tree_sum(taps) + b_ref[...]
    if act == "swish":
        out = out * jax.nn.sigmoid(out)
    o_ref[...] = out.astype(o_ref.dtype)
    # fused SE squeeze: the whole spatial extent of this channel tile is resident in VMEM
    sum_ref[...] = jnp.sum(out, axis=(0, 1))[None, :]


def dwconv_s1(x_sp, w, b, k, act="swish"):
    """Stride-1 depthwise conv, TF 'same' padding. x_sp: (Nb, H, W, C) bf16, w: (k*k, C) f32.
       Returns (y bf16 (Nb,H,W,C), channel sums f32 (Nb, C))."""
    nb, h, wdt, c = x_sp.shape
    pad = k - 1
    pt = pad // 2
    xp = jnp.pad(x_sp, ((0, 0), (pt, pad - pt), (pt, pad - pt), (0, 0)))
    hp, wp = h + pad, wdt + pad
    tc = _pick_channel_tile(c, hp * wp)
    nc = c // tc
    y, s = pl.pallas_call(
        functools.partial(_dw_s1_kernel, k=k, oh=h, ow=wdt, act=act),
        out_shape=(jax.ShapeDtypeStruct((nb, h, wdt, c), jnp.bfloat16),
                   jax.ShapeDtypeStruct((nb, 1, c), jnp.float32)),
        grid=(nb, nc),
        in_specs=[
            pl.BlockSpec((None, hp, wp, tc), lambda bb, cc: (bb, 0, 0, cc)),
            pl.BlockSpec((k * k, tc), lambda bb, cc: (0, cc)),
            pl.BlockSpec((1, tc), lambda bb, cc: (0, cc)),
        ],
        out_specs=(pl.BlockSpec((None, h, wdt, tc), lambda bb, cc: (bb, 0, 0, cc)),
                   pl.BlockSpec((None, 1, tc), lambda bb, cc: (bb, 0, cc))),
        compiler_params=_cparams(("parallel", "parallel")),
    )(xp, w, b.reshape(1, c))
    return y, s.reshape(nb, c)


# ----------------------------------------------------------------------------
# Depthwise conv, stride 2 (only 4 convs in the net): bf16 im2col patches + per-channel MAC.
# TODO(synk): replace with an in-VMEM strided-tap kernel to remove the last im2col blow-up.
# ----------------------------------------------------------------------------
def _dw_patch_kernel(p_ref, w_ref, b_ref, o_ref, *, kk, act):
    p = p_ref[...].astype(jnp.float32)             # (tm, kk, C)
    w = w_ref[...]                                 # (kk, C)
    taps = [p[:, t, :] * w[t] for t in range(kk)]
    out = _tree_sum(taps) + b_ref[...]
    if act == "swish":
        out = out * jax.nn.sigmoid(out)
    o_ref[...] = out.astype(o_ref.dtype)


def depthwise_patches(patches2, w, b, act="swish"):
    m, kk, c = patches2.shape
    tm = _pick_div(m, _ROW_TILES)
    return pl.pallas_call(
        functools.partial(_dw_patch_kernel, kk=kk, act=act),
        out_shape=jax.ShapeDtypeStruct((m, c), jnp.bfloat16),
        grid=(m // tm,),
        in_specs=[
            pl.BlockSpec((tm, kk, c), lambda i: (i, 0, 0)),
            pl.BlockSpec((kk, c), lambda i: (0, 0)),
            pl.BlockSpec((1, c), lambda i: (0, 0)),
        ],
        out_specs=pl.BlockSpec((tm, c), lambda i: (i, 0)),
        compiler_params=_cparams(("parallel",)),
    )(patches2, w, b.reshape(1, c))


def same_pad_patches(x, k, stride):
    """x: (N, H, W, C) -> patches (N, oh, ow, k*k, C) with TF 'same' padding (XLA-side)."""
    n, h, w, c = x.shape
    oh = -(-h // stride)
    ow = -(-w // stride)
    pad_h = max((oh - 1) * stride + k - h, 0)
    pad_w = max((ow - 1) * stride + k - w, 0)
    xp = jnp.pad(
        x,
        ((0, 0), (pad_h // 2, pad_h - pad_h // 2), (pad_w // 2, pad_w - pad_w // 2), (0, 0)),
    )
    taps = []
    for ky in range(k):
        for kx in range(k):
            taps.append(xp[:, ky:ky + stride * oh:stride, kx:kx + stride * ow:stride, :])
    return jnp.stack(taps, axis=3), oh, ow


def dwconv_strided(x_sp, w, b, k, stride, act="swish"):
    nb, h, wdt, c = x_sp.shape
    patches, oh, ow = same_pad_patches(x_sp, k, stride)
    y = depthwise_patches(patches.reshape(nb * oh * ow, k * k, c), w, b, act)
    return y.reshape(nb, oh, ow, c), oh, ow


# ----------------------------------------------------------------------------
# Global average pool over HW (tiled, accumulate in the resident output block)
# ----------------------------------------------------------------------------
def _gap_kernel(x_ref, o_ref, *, nsteps, inv):
    j = pl.program_id(1)

    @pl.when(j == 0)
    def _():
        o_ref[...] = jnp.zeros_like(o_ref)

    o_ref[...] += jnp.sum(x_ref[...].astype(jnp.float32), axis=0, keepdims=True)

    @pl.when(j == nsteps - 1)
    def _():
        o_ref[...] = o_ref[...] * inv


def global_avg_pool(x, mean=True):
    """x: (Nb, HW, C) bf16/f32 -> (Nb, C) f32 (mean or sum)."""
    nb, hw, c = x.shape
    thw = _pick_div(hw, _ROW_TILES)
    nsteps = hw // thw
    out = pl.pallas_call(
        functools.partial(_gap_kernel, nsteps=nsteps, inv=(1.0 / hw if mean else 1.0)),
        out_shape=jax.ShapeDtypeStruct((nb, 1, c), jnp.float32),
        grid=(nb, nsteps),
        in_specs=[pl.BlockSpec((None, thw, c), lambda bb, j: (bb, j, 0))],
        out_specs=pl.BlockSpec((None, 1, c), lambda bb, j: (bb, 0, 0)),
        compiler_params=_cparams(("parallel", "arbitrary")),
    )(x)
    return out.reshape(nb, c)


# ----------------------------------------------------------------------------
# Fused SE excitation: gate = sigmoid(swish(mean @ W1 + b1) @ W2 + b2)   (single kernel)
# ----------------------------------------------------------------------------
def _se_kernel(s_ref, w1_ref, b1_ref, w2_ref, b2_ref, g_ref, *, inv_hw):
    s = s_ref[...] * inv_hw                                         # (Nb, C) f32 mean
    h = jnp.dot(s.astype(jnp.bfloat16), w1_ref[...],
                preferred_element_type=jnp.float32) + b1_ref[...]
    h = h * jax.nn.sigmoid(h)                                       # swish
    g = jnp.dot(h.astype(jnp.bfloat16), w2_ref[...],
                preferred_element_type=jnp.float32) + b2_ref[...]
    g_ref[...] = jax.nn.sigmoid(g)


def se_gate(sums, hw_count, sep):
    """sums: (Nb, C) per-channel sums (f32) -> per-sample channel gate (Nb, C) f32."""
    nb, c = sums.shape
    return pl.pallas_call(
        functools.partial(_se_kernel, inv_hw=1.0 / float(hw_count)),
        out_shape=jax.ShapeDtypeStruct((nb, c), jnp.float32),
        compiler_params=pltpu.CompilerParams(vmem_limit_bytes=_vmem_limit_bytes()),
    )(sums, sep["w_red"], sep["b_red"].reshape(1, -1),
      sep["w_exp"], sep["b_exp"].reshape(1, -1))


# ----------------------------------------------------------------------------
# ADL landmark mask (inference-mode approximation; see TODO at top) — row-tiled
# ----------------------------------------------------------------------------
def _adl_kernel(x_ref, lm_ref, xo_ref, mo_ref):
    x = x_ref[...].astype(jnp.float32)              # (thw, C)
    att = jnp.mean(x, axis=1, keepdims=True)        # channel-mean attention (thw, 1)
    mask = jax.nn.sigmoid(att) * lm_ref[...]        # fuse with provided landmark mask
    xo_ref[...] = (x * mask).astype(xo_ref.dtype)
    mo_ref[...] = mask


def adl_landmarkmask_call(x, lm):
    nb, hw, c = x.shape
    thw = _row_tile(hw, nb)
    nm = pl.cdiv(hw, thw)
    return pl.pallas_call(
        _adl_kernel,
        out_shape=(
            jax.ShapeDtypeStruct((nb, hw, c), jnp.bfloat16),
            jax.ShapeDtypeStruct((nb, hw, 1), jnp.float32),
        ),
        grid=(nb, nm),
        in_specs=[
            pl.BlockSpec((None, thw, c), lambda bb, i: (bb, i, 0)),
            pl.BlockSpec((None, thw, 1), lambda bb, i: (bb, i, 0)),
        ],
        out_specs=(
            pl.BlockSpec((None, thw, c), lambda bb, i: (bb, i, 0)),
            pl.BlockSpec((None, thw, 1), lambda bb, i: (bb, i, 0)),
        ),
        compiler_params=_cparams(("parallel", "parallel")),
    )(x, lm)


def apply_adl(x, hw_shape, lm_nchw):
    nb, hw, c = x.shape
    h, w = hw_shape
    lm = jnp.transpose(lm_nchw, (0, 2, 3, 1)).reshape(nb, hw, 1).astype(jnp.float32)
    xo, mo = adl_landmarkmask_call(x, lm)
    mask = jnp.transpose(mo.reshape(nb, h, w, 1), (0, 3, 1, 2))     # back to (N,1,H,W)
    return xo, mask


# ----------------------------------------------------------------------------
# Blocks
# ----------------------------------------------------------------------------
def _dw_conv(x, hw_shape, p):
    """Returns (y (Nb,HW,C) bf16, hw_shape, per-channel sums f32 for the SE squeeze)."""
    h, w = hw_shape
    nb, hwn, c = x.shape
    x_sp = x.reshape(nb, h, w, c)
    if p["stride"] == 1:
        y, sums = dwconv_s1(x_sp, p["dw_w"], p["dw_b"], p["k"], act="swish")
        return y.reshape(nb, h * w, c), (h, w), sums
    y, oh, ow = dwconv_strided(x_sp, p["dw_w"], p["dw_b"], p["k"], p["stride"], act="swish")
    y2 = y.reshape(nb, oh * ow, c)
    sums = global_avg_pool(y2, mean=False)          # SE squeeze (sum) for the 4 strided blocks
    return y2, (oh, ow), sums


def ds_block(x, hw_shape, p):
    # DepthwiseSeparableConv: dw -> bn -> swish -> SE -> pw -> bn (+ residual)
    shortcut = x
    x, hw_shape, sums = _dw_conv(x, hw_shape, p)
    gate = se_gate(sums, hw_shape[0] * hw_shape[1], p["se"])
    res = shortcut if p["has_residual"] else None
    x = fused_pw_conv(x, p["pw_w"], p["pw_b"], act="none", scale=gate, residual=res)
    return x, hw_shape


def ir_block(x, hw_shape, p):
    # InvertedResidual: pw-exp -> bn -> swish -> dw -> bn -> swish -> SE -> pw-lin -> bn (+ res)
    shortcut = x
    x = fused_pw_conv(x, p["exp_w"], p["exp_b"], act="swish")
    x, hw_shape, sums = _dw_conv(x, hw_shape, p)
    gate = se_gate(sums, hw_shape[0] * hw_shape[1], p["se"])
    res = shortcut if p["has_residual"] else None
    x = fused_pw_conv(x, p["pwl_w"], p["pwl_b"], act="none", scale=gate, residual=res)
    return x, hw_shape


def stem_conv(x_nhwc, w, b):
    nb = x_nhwc.shape[0]
    patches, oh, ow = same_pad_patches(x_nhwc, 3, 2)        # bf16 patches (K = 27)
    p2d = patches.reshape(nb, oh * ow, -1)
    y = fused_pw_conv(p2d, w, b, act="swish")
    return y, (oh, ow)


# ----------------------------------------------------------------------------
# Deterministic parameter construction (EfficientNet-B7: ch_mult=2.0, depth_mult=3.1)
# ----------------------------------------------------------------------------
class ParamGen:
    def __init__(self, seed):
        self.key = jax.random.PRNGKey(seed)
        self.count = 0

    def next(self):
        self.count += 1
        return jax.random.fold_in(self.key, self.count)


def _normal(key, shape, std):
    return std * jax.random.normal(key, shape, dtype=jnp.float32)


def fold_bn(w, gamma, beta, mean, var, eps=BN_EPS):
    scale = gamma / jnp.sqrt(var + eps)
    return w * scale, beta - mean * scale


def make_conv_bn_params(pg, cin, cout, k):
    fan_in = k * k * cin
    w = _normal(pg.next(), (k * k * cin, cout), 1.0 / math.sqrt(fan_in))
    ones, zeros = jnp.ones((cout,), jnp.float32), jnp.zeros((cout,), jnp.float32)
    w, b = fold_bn(w, ones, zeros, zeros, ones)
    return w.astype(jnp.bfloat16), b          # bf16 MXU operand, f32 bias


def make_dwconv_bn_params(pg, c, k):
    w = _normal(pg.next(), (k * k, c), 1.0 / math.sqrt(k * k))
    ones, zeros = jnp.ones((c,), jnp.float32), jnp.zeros((c,), jnp.float32)
    return fold_bn(w, ones, zeros, zeros, ones)   # keep f32 (VPU path)


def make_linear_params(pg, cin, cout):
    w = _normal(pg.next(), (cin, cout), 1.0 / math.sqrt(cin))
    return w.astype(jnp.bfloat16), jnp.zeros((cout,), jnp.float32)


def make_se_params(pg, chans, reduced):
    w_red, b_red = make_linear_params(pg, chans, reduced)
    w_exp, b_exp = make_linear_params(pg, reduced, chans)
    return dict(w_red=w_red, b_red=b_red, w_exp=w_exp, b_exp=b_exp)


def build_efficientnet_b7_params(seed=8664):
    pg = ParamGen(seed)
    stem_ch = 64                       # round_channels(32, 2.0, 8)
    num_features = 2560                # round_channels(1280, 2.0, 8)
    # (type, repeats[ceil(r*3.1)], kernel, stride, expand, out_ch[round_channels(c,2.0,8)])
    stage_cfg = [
        ("ds", 4, 3, 1, 1, 32),
        ("ir", 7, 3, 2, 6, 48),
        ("ir", 7, 5, 2, 6, 80),
        ("ir", 10, 3, 2, 6, 160),
        ("ir", 10, 5, 1, 6, 224),
        ("ir", 13, 5, 2, 6, 384),
        ("ir", 4, 3, 1, 6, 640),
    ]
    params = {}
    params["stem_w"], params["stem_b"] = make_conv_bn_params(pg, 3, stem_ch, 3)
    stages = []
    cin = stem_ch
    for (btype, reps, k, stride, expand, cout) in stage_cfg:
        blocks = []
        for r in range(reps):
            s = stride if r == 0 else 1
            bp = {"type": btype, "k": k, "stride": s,
                  "has_residual": (s == 1 and cin == cout)}
            se_reduced = max(1, int(cin * 0.25))
            if btype == "ds":
                bp["dw_w"], bp["dw_b"] = make_dwconv_bn_params(pg, cin, k)
                bp["se"] = make_se_params(pg, cin, se_reduced)
                bp["pw_w"], bp["pw_b"] = make_conv_bn_params(pg, cin, cout, 1)
            else:
                mid = cin * expand
                bp["exp_w"], bp["exp_b"] = make_conv_bn_params(pg, cin, mid, 1)
                bp["dw_w"], bp["dw_b"] = make_dwconv_bn_params(pg, mid, k)
                bp["se"] = make_se_params(pg, mid, se_reduced)
                bp["pwl_w"], bp["pwl_b"] = make_conv_bn_params(pg, mid, cout, 1)
            blocks.append(bp)
            cin = cout
        stages.append(blocks)
    params["stages"] = stages
    params["head_w"], params["head_b"] = make_conv_bn_params(pg, cin, num_features, 1)
    params["fc_w"], params["fc_b"] = make_linear_params(pg, num_features, 1)
    return params


# ----------------------------------------------------------------------------
# Full forward pass (EfficientNetGenAutoADL.forward)
# ----------------------------------------------------------------------------
def efficientnet_gen_auto_adl_forward(params, x_nchw, landmark_mask2, landmark_mask5,
                                      att_block_idx=(2, 5)):
    nb = x_nchw.shape[0]
    x_nhwc = jnp.transpose(x_nchw, (0, 2, 3, 1)).astype(jnp.bfloat16)   # NCHW -> NHWC, bf16
    # conv_stem -> bn1 -> swish
    x, hw_shape = stem_conv(x_nhwc, params["stem_w"], params["stem_b"])
    mask2 = mask5 = None
    for idx, blocks in enumerate(params["stages"]):
        for bp in blocks:
            if bp["type"] == "ds":
                x, hw_shape = ds_block(x, hw_shape, bp)
            else:
                x, hw_shape = ir_block(x, hw_shape, bp)
        if idx == att_block_idx[0]:
            x, mask2 = apply_adl(x, hw_shape, landmark_mask2)
        if idx == att_block_idx[1]:
            x, mask5 = apply_adl(x, hw_shape, landmark_mask5)
    # conv_head -> bn2 -> swish
    x = fused_pw_conv(x, params["head_w"], params["head_b"], act="swish")
    # AdaptiveAvgPool2d((1,1)) + flatten(1)
    feat = global_avg_pool(x)                                          # (Nb, 2560) f32
    # Dropout(p=0) is identity; fc: Linear(2560, 1)
    logits = fused_pw_conv(feat.reshape(1, nb, feat.shape[1]),
                           params["fc_w"], params["fc_b"], act="none",
                           out_dtype=jnp.float32).reshape(nb, 1)
    return logits, mask2, mask5


if __name__ == "__main__":
    key = jax.random.PRNGKey(0)
    k1, k2, k3 = jax.random.split(key, 3)
    N, H, W = 2, 64, 64
    x = jax.random.normal(k1, (N, 3, H, W), dtype=jnp.float32)
    # stage-2 output is 8x8 and stage-5 output is 2x2 for a 64x64 input
    lm2 = jax.random.uniform(k2, (N, 1, 8, 8), dtype=jnp.float32)
    lm5 = jax.random.uniform(k3, (N, 1, 2, 2), dtype=jnp.float32)

    params = build_efficientnet_b7_params(seed=8664)
    logits, mask2, mask5 = efficientnet_gen_auto_adl_forward(params, x, lm2, lm5)
    (logits, mask2, mask5) = jax.block_until_ready((logits, mask2, mask5))

    assert logits.shape == (N, 1)
    assert mask2.shape == (N, 1, 8, 8)
    assert mask5.shape == (N, 1, 2, 2)
    assert bool(jnp.all(jnp.isfinite(logits)))
    print("KERNEL_OK")
</pallas_src>

<mosaic_0001>
module attributes {stable_mosaic.version = 11 : i64} {
  func.func @_pw_kernel(%arg0: i32, %arg1: i32, %arg2: i32, %arg3: i32, %arg4: memref<1x512x27xbf16, #tpu.memory_space<vmem>>, %arg5: memref<27x64xbf16, #tpu.memory_space<vmem>>, %arg6: memref<1x64xf32, #tpu.memory_space<vmem>>, %arg7: memref<1x512x64xbf16, #tpu.memory_space<vmem>>) attributes {dimension_semantics = [#tpu.dimension_semantics<parallel>, #tpu.dimension_semantics<parallel>, #tpu.dimension_semantics<parallel>, #tpu.dimension_semantics<arbitrary>], iteration_bounds = array<i64: 2, 2, 1, 1>, scalar_prefetch = 0 : i64, scratch_operands = 0 : i64, tpu.core_type = #tpu.core_type<tc>, window_params = [{transform_indices = @transform_0, window_bounds = array<i64: 1, 512, 27>}, {transform_indices = @transform_1, window_bounds = array<i64: 27, 64>}, {transform_indices = @transform_2, window_bounds = array<i64: 1, 64>}, {transform_indices = @transform_3, window_bounds = array<i64: 1, 512, 64>}]} {
    %c0 = arith.constant 0 : index
    %c0_0 = arith.constant 0 : index
    %c0_1 = arith.constant 0 : index
    %0 = vector.load %arg4[%c0, %c0_0, %c0_1] : memref<1x512x27xbf16, #tpu.memory_space<vmem>>, vector<1x512x27xbf16>
    %1 = vector.shape_cast %0 : vector<1x512x27xbf16> to vector<512x27xbf16>
    %c0_2 = arith.constant 0 : index
    %c0_3 = arith.constant 0 : index
    %2 = vector.load %arg5[%c0_2, %c0_3] : memref<27x64xbf16, #tpu.memory_space<vmem>>, vector<27x64xbf16>
    %cst = arith.constant dense<0.000000e+00> : vector<512x64xf32>
    %3 = tpu.matmul %1, %2, %cst {dimension_numbers = #tpu.dot_dimension_numbers<[1], [0], [0], [1], [0, 0, 1, 1], [], []>} : vector<512x27xbf16>, vector<27x64xbf16>, vector<512x64xf32> -> vector<512x64xf32>
    %c0_4 = arith.constant 0 : index
    %c0_5 = arith.constant 0 : index
    %4 = vector.load %arg6[%c0_4, %c0_5] : memref<1x64xf32, #tpu.memory_space<vmem>>, vector<1x64xf32>
    %5 = vector.broadcast %4 : vector<1x64xf32> to vector<512x64xf32>
    %6 = arith.addf %3, %5 : vector<512x64xf32>
    %7 = arith.negf %6 : vector<512x64xf32>
    %8 = math.exp %7 : vector<512x64xf32>
    %cst_6 = arith.constant 1.000000e+00 : f32
    %9 = vector.broadcast %cst_6 : f32 to vector<512x64xf32>
    %10 = arith.addf %9, %8 : vector<512x64xf32>
    %11 = arith.divf %9, %10 : vector<512x64xf32>
    %12 = arith.mulf %6, %11 : vector<512x64xf32>
    %13 = arith.truncf %12 : vector<512x64xf32> to vector<512x64xbf16>
    %c0_7 = arith.constant 0 : index
    %c0_8 = arith.constant 0 : index
    %c0_9 = arith.constant 0 : index
    %14 = vector.load %arg7[%c0_7, %c0_8, %c0_9] : memref<1x512x64xbf16, #tpu.memory_space<vmem>>, vector<1x512x64xbf16>
    %15 = vector.shape_cast %14 : vector<1x512x64xbf16> to vector<512x64xbf16>
    %16 = vector.shape_cast %13 : vector<512x64xbf16> to vector<1x512x64xbf16>
    tpu.vector_store %arg7[%c0_7, %c0_8, %c0_9], %16 {strides = array<i32>} : memref<1x512x64xbf16, #tpu.memory_space<vmem>>, vector<1x512x64xbf16>,
    return
  }
  func.func @transform_0(%arg0: i32, %arg1: i32, %arg2: i32, %arg3: i32) -> (i32, i32, i32) {
    %c0_i32 = arith.constant 0 : i32
    return %arg0, %arg1, %arg3 : i32, i32, i32
  }
  func.func @transform_1(%arg0: i32, %arg1: i32, %arg2: i32, %arg3: i32) -> (i32, i32) {
    %c0_i32 = arith.constant 0 : i32
    return %arg3, %arg2 : i32, i32
  }
  func.func @transform_2(%arg0: i32, %arg1: i32, %arg2: i32, %arg3: i32) -> (i32, i32) {
    %c0_i32 = arith.constant 0 : i32
    %c0_i32_0 = arith.constant 0 : i32
    return %c0_i32, %arg2 : i32, i32
  }
  func.func @transform_3(%arg0: i32, %arg1: i32, %arg2: i32, %arg3: i32) -> (i32, i32, i32) {
    %c0_i32 = arith.constant 0 : i32
    return %arg0, %arg1, %arg2 : i32, i32, i32
  }
}

</mosaic_0001>

<llo_original>
// kernel: tpu_custom_call.1
$region0: #{tpu_custom_call.1}
  #allocation0 [shape = 'u32[]', space=smem, size = 0x4, offset = 0x4, fixed_abs, tag = 'smem constant byte address 0x4 - core index']
  #allocation1 [shape = 'u32[144,128]{1,0:T(1,128)}', space=vmem, size = 0x12000, scoped, tag = 'internal scratch']
  %s0 = inlined_call_operand.hbm [shape: bf16[2,1024,27], index: 0, kind: input, shape index: {}]
  %s1 = inlined_call_operand.hbm [shape: bf16[27,64], index: 1, kind: input, shape index: {}]
  %s2 = inlined_call_operand.hbm [shape: f32[1,64], index: 2, kind: input, shape index: {}]
  %s3 = inlined_call_operand.hbm [shape: bf16[2,1024,64], index: 3, kind: output, shape index: {}]
  %s4 = sld [smem:[#allocation0]]
  $region57: #{tpu_custom_call.1} parent=0
    _
  %s6 = ssub.s32 1, %s4
  %s7 = scalar_select 0, %s6, %s4
  $region1: #{tpu_custom_call.1} parent=0
    #allocation2 [shape = 'u8[262144]{0}', space=vmem, size = 0x40000, scoped, tag = 'input window, operand 0']
    #allocation3 [shape = 's32[2]{0}', space=sflag, size = 0x8, scoped, tag = 'scoped memory for tpu_custom_call.1']
    #allocation4 [shape = 's32[2]{0}', space=sflag, size = 0x8, scoped, tag = 'scoped memory for tpu_custom_call.1']
    #allocation5 [shape = 'u8[8192]{0}', space=vmem, size = 0x2000, scoped, tag = 'input window, operand 1, single buffered']
    #allocation6 [shape = 's32[1]{0}', space=sflag, size = 0x4, scoped, tag = 'scoped memory for tpu_custom_call.1']
    #allocation7 [shape = 'u8[512]{0}', space=vmem, size = 0x400, scoped, tag = 'input window, operand 2, single buffered']
    #allocation8 [shape = 'u8[262144]{0}', space=vmem, size = 0x40000, scoped, tag = 'output window, operand 0']
    %8 = vsyncpa [#allocation3], 0
    %s9 = scalar_lea.sflag [#allocation3], 1
    %10 = vsyncpa %s9, 0
    %11 = vsyncpa [#allocation6], 0
    %12 = vsyncpa [#allocation4], 0
    %s13 = scalar_lea.sflag [#allocation4], 1
    %14 = vsyncpa %s13, 0
    loop: start=0, step=1, limit=6
    $region2: #{tpu_custom_call.1} parent=1 // loop_pre_header
      _
    $region3: #{tpu_custom_call.1} parent=1 // loop_header
      %s16 = sphi 0, %s20
      %p17 = scmp.ge.s32.totalorder %s16, 6
      %s23 = sphi 0, %s49
      %s24 = sphi 0, %s45
      %s25 = sphi 0, %s41
      %s26 = sphi 0, %s37
      %s27 = sphi 0, %s23
      %s28 = sphi 0, %s24
      %s29 = sphi 0, %s25
      %s30 = sphi 0, %s26
      %s31 = sphi 0, %s27
      %s32 = sphi 0, %s28
      %s33 = sphi 0, %s29
      %s34 = sphi 0, %s30
      %s56 = sphi 0, %s58
      %s59 = sphi 0, %s56
      %s60 = sphi 0, %s59
      %s76 = sphi 0, %s60
      %s84 = sphi 0, %s86
      %s87 = sphi 0, %s84
      %s88 = sphi 0, %s87
      %s104 = sphi 0, %s88
      %s110 = sphi 0, %s112
      %s113 = sphi 0, %s110
      %s114 = sphi 0, %s113
      %s130 = sphi 0, %s114
      %s140 = sphi 0, %s142
      %s143 = sphi 0, %s140
      %s144 = sphi 0, %s143
      %s160 = sphi 0, %s144
    $region4: #{tpu_custom_call.1} parent=1 // loop_header_branch
      %19 = sbr.rel (%p17) target = $region8
    $region5: #{tpu_custom_call.1} parent=1 // loop_body
      %s21 = ssub.s32 %s16, 1
      %s22 = ssub.s32 %s16, 2
      %s35 = sadd.s32 1, %s26
      %p36 = scmp.ge.s32.totalorder %s35, 1
      %s37 = scalar_select %p36, 0, %s35
      %s38 = sadd.s32 1, %s25
      %s39 = scalar_select %p36, %s38, %s25
      %p40 = scmp.ge.s32.totalorder %s39, 1
      %s41 = scalar_select %p40, 0, %s39
      %s42 = sadd.s32 1, %s24
      %s43 = scalar_select %p40, %s42, %s24
      %p44 = scmp.ge.s32.totalorder %s43, 2
      %s45 = scalar_select %p44, 0, %s43
      %s46 = sadd.s32 1, %s23
      %s47 = scalar_select %p44, %s46, %s23
      %p48 = scmp.ge.s32.totalorder %s47, 2
      %s49 = scalar_select %p48, 0, %s47
      %s50 = ssub.s32 %s23, %s49
      %s51 = ssub.s32 %s24, %s45
      %s52 = sor.u32 %s50, %s51
      %s53 = ssub.s32 %s26, %s37
      %s54 = sor.u32 %s52, %s53
      %p55 = scmp.eq.s32.totalorder %s54, 0
      %s57 = sadd.s32 %s56, 1
      %s58 = scalar_select %p55, %s56, %s57
      %p61 = pneg %p55
      %p62 = scmp.eq.s32.totalorder %s16, 3
      %p63 = por %p61, %p62
      %p64 = scmp.ne.s32.totalorder %s56, %s59
      %p65 = scmp.eq.s32.totalorder %s16, 0
      %p66 = por %p64, %p65
      %p67 = scmp.ne.s32.totalorder %s56, %s59
      %p68 = scmp.eq.s32.totalorder %s21, 3
      %p69 = por %p67, %p68
      %p70 = scmp.ne.s32.totalorder %s59, %s60
      %p71 = scmp.eq.s32.totalorder %s21, 0
      %p72 = por %p70, %p71
      %p73 = scmp.ne.s32.totalorder %s59, %s60
      %p74 = scmp.eq.s32.totalorder %s22, 3
      %p75 = por %p73, %p74
      %p77 = scmp.ne.s32.totalorder %s60, %s76
      %p78 = scmp.eq.s32.totalorder %s22, 0
      %p79 = por %p77, %p78
      %s80 = ssub.s32 %s26, %s37
      %s81 = ssub.s32 %s25, %s41
      %s82 = sor.u32 %s80, %s81
      %p83 = scmp.eq.s32.totalorder %s82, 0
      %s85 = sadd.s32 %s84, 1
      %s86 = scalar_select %p83, %s84, %s85
      %p89 = pneg %p83
      %p90 = scmp.eq.s32.totalorder %s16, 3
      %p91 = por %p89, %p90
      %p92 = scmp.ne.s32.totalorder %s84, %s87
      %p93 = scmp.eq.s32.totalorder %s16, 0
      %p94 = por %p92, %p93
      %p95 = scmp.ne.s32.totalorder %s84, %s87
      %p96 = scmp.eq.s32.totalorder %s21, 3
      %p97 = por %p95, %p96
      %p98 = scmp.ne.s32.totalorder %s87, %s88
      %p99 = scmp.eq.s32.totalorder %s21, 0
      %p100 = por %p98, %p99
      %p101 = scmp.ne.s32.totalorder %s87, %s88
      %p102 = scmp.eq.s32.totalorder %s22, 3
      %p103 = por %p101, %p102
      %p105 = scmp.ne.s32.totalorder %s88, %s104
      %p106 = scmp.eq.s32.totalorder %s22, 0
      %p107 = por %p105, %p106
      %s108 = ssub.s32 %s25, %s41
      %p109 = scmp.eq.s32.totalorder %s108, 0
      %s111 = sadd.s32 %s110, 1
      %s112 = scalar_select %p109, %s110, %s111
      %p115 = pneg %p109
      %p116 = scmp.eq.s32.totalorder %s16, 3
      %p117 = por %p115, %p116
      %p118 = scmp.ne.s32.totalorder %s110, %s113
      %p119 = scmp.eq.s32.totalorder %s16, 0
      %p120 = por %p118, %p119
      %p121 = scmp.ne.s32.totalorder %s110, %s113
      %p122 = scmp.eq.s32.totalorder %s21, 3
      %p123 = por %p121, %p122
      %p124 = scmp.ne.s32.totalorder %s113, %s114
      %p125 = scmp.eq.s32.totalorder %s21, 0
      %p126 = por %p124, %p125
      %p127 = scmp.ne.s32.totalorder %s113, %s114
      %p128 = scmp.eq.s32.totalorder %s22, 3
      %p129 = por %p127, %p128
      %p131 = scmp.ne.s32.totalorder %s114, %s130
      %p132 = scmp.eq.s32.totalorder %s22, 0
      %p133 = por %p131, %p132
      %s134 = ssub.s32 %s23, %s49
      %s135 = ssub.s32 %s24, %s45
      %s136 = sor.u32 %s134, %s135
      %s137 = ssub.s32 %s25, %s41
      %s138 = sor.u32 %s136, %s137
      %p139 = scmp.eq.s32.totalorder %s138, 0
      %s141 = sadd.s32 %s140, 1
      %s142 = scalar_select %p139, %s140, %s141
      %p145 = pneg %p139
      %p146 = scmp.eq.s32.totalorder %s16, 3
      %p147 = por %p145, %p146
      %p148 = scmp.ne.s32.totalorder %s140, %s143
      %p149 = scmp.eq.s32.totalorder %s16, 0
      %p150 = por %p148, %p149
      %p151 = scmp.ne.s32.totalorder %s140, %s143
      %p152 = scmp.eq.s32.totalorder %s21, 3
      %p153 = por %p151, %p152
      %p154 = scmp.ne.s32.totalorder %s143, %s144
      %p155 = scmp.eq.s32.totalorder %s21, 0
      %p156 = por %p154, %p155
      %p157 = scmp.ne.s32.totalorder %s143, %s144
      %p158 = scmp.eq.s32.totalorder %s22, 3
      %p159 = por %p157, %p158
      %p161 = scmp.ne.s32.totalorder %s144, %s160
      %p162 = scmp.eq.s32.totalorder %s22, 0
      %p163 = por %p161, %p162
      %p164 = scmp.le.s32.totalorder 1, %s16
      %p165 = scmp.lt.s32.totalorder %s16, 5
      %p166 = pnand %p164, %p165
      %p167 = pneg %p166
      // Predicated region
      $region9: #{tpu_custom_call.1} parent=5 // pred_check
        _
      $region10: #{tpu_custom_call.1} parent=5 // pred_check_branch
        %169 = sbr.rel (%p166) target = $region12
      $region11: #{tpu_custom_call.1} parent=5 // pred_region
        %s170 = ssub.s32 %s16, 1
        // Predicated region
        $region13: #{tpu_custom_call.1} parent=11 // pred_check
          %p171 = pneg %p100
        $region14: #{tpu_custom_call.1} parent=11 // pred_check_branch
          %173 = sbr.rel (%p171) target = $region16
        $region15: #{tpu_custom_call.1} parent=11 // pred_region
          %s174 = smul.u32 4, %s30
          %s176 = ssub.s32 256, 256
          %177 = vsyncadd [#allocation6], %s176
          %s178 = sadd.s32 %s29, %s174
          %s179 = smul.addr %s178, 64
          %s180 = scalar_lea.hbm %s1, %s179
          %s181 = sshll.u32 [#allocation5], 4
          %s182 = int_to_ptr.vmem [resolvable:$true] %s181
          %187 = dma.hbm_to_vmem [thread:$0]  %s180, 256, %s182, [#allocation6], 64, 64, 4
        $region16: #{tpu_custom_call.1} parent=11 // pred_fallthru
          _
        // Predicated region
        $region17: #{tpu_custom_call.1} parent=11 // pred_check
          %p188 = pneg %p126
        $region18: #{tpu_custom_call.1} parent=11 // pred_check_branch
          %190 = sbr.rel (%p188) target = $region20
        $region19: #{tpu_custom_call.1} parent=11 // pred_region
          %s192 = ssub.s32 16, 16
          %193 = vsyncadd [#allocation6], %s192
          %s194 = smul.addr %s29, 16
          %s195 = scalar_lea.hbm %s2, %s194
          %s197 = sshll.u32 [#allocation7], 4
          %s198 = int_to_ptr.vmem [resolvable:$true] %s197
          %200 = dma.hbm_to_vmem [thread:$0]  %s195, 16, %s198, [#allocation6]
        $region20: #{tpu_custom_call.1} parent=11 // pred_fallthru
          _
      $region12: #{tpu_custom_call.1} parent=5 // pred_fallthru
        _
      %p201 = scmp.lt.s32.totalorder %s16, 4
      // Predicated region
      $region21: #{tpu_custom_call.1} parent=5 // pred_check
        %p202 = pneg %p201
      $region22: #{tpu_custom_call.1} parent=5 // pred_check_branch
        %204 = sbr.rel (%p202) target = $region24
      $region23: #{tpu_custom_call.1} parent=5 // pred_region
        // Predicated region
        $region25: #{tpu_custom_call.1} parent=23 // pred_check
          %p205 = pneg %p66
        $region26: #{tpu_custom_call.1} parent=23 // pred_check_branch
          %207 = sbr.rel (%p205) target = $region28
        $region27: #{tpu_custom_call.1} parent=23 // pred_region
          %s208 = sand.u32 %s56, 1
          %s209 = scalar_lea.sflag [#allocation3], %s208
          %s210 = sand.u32 %s56, 1
          %s211 = smul.addr %s210, 256
          %s212 = scalar_lea.vmem [#allocation2], %s211
          %s213 = smul.u32 64, %s24
          %s215 = ssub.s32 4096, 4096
          %216 = vsyncadd %s209, %s215
          %s217 = sadd.s32 %s26, %s213
          %s218 = smul.addr %s23, 128
          %s219 = sadd.s32 %s217, %s218
          %s220 = smul.addr %s219, 64
          %s221 = scalar_lea.hbm %s0, %s220
          %s222 = sshll.u32 %s212, 4
          %s223 = int_to_ptr.vmem [resolvable:$true] %s222
          %228 = dma.hbm_to_vmem [thread:$0]  %s221, 4096, %s223, %s209, 64, 64, 4
        $region28: #{tpu_custom_call.1} parent=23 // pred_fallthru
          _
      $region24: #{tpu_custom_call.1} parent=5 // pred_fallthru
        _
      %p229 = scmp.le.s32.totalorder 1, %s16
      %p230 = scmp.lt.s32.totalorder %s16, 5
      %p231 = pnand %p229, %p230
      %p232 = pneg %p231
      // Predicated region
      $region29: #{tpu_custom_call.1} parent=5 // pred_check
        _
      $region30: #{tpu_custom_call.1} parent=5 // pred_check_branch
        %234 = sbr.rel (%p231) target = $region32
      $region31: #{tpu_custom_call.1} parent=5 // pred_region
        %s235 = ssub.s32 %s16, 1
        %s236 = sand.u32 %s59, 1
        %s237 = scalar_lea.sflag [#allocation3], %s236
        %s238 = sand.u32 %s59, 1
        %s239 = smul.addr %s238, 256
        %s240 = scalar_lea.vmem [#allocation2], %s239
        // Predicated region
        $region33: #{tpu_custom_call.1} parent=31 // pred_check
          %p241 = pneg %p72
        $region34: #{tpu_custom_call.1} parent=31 // pred_check_branch
          %243 = sbr.rel (%p241) target = $region36
        $region35: #{tpu_custom_call.1} parent=31 // pred_region
          %244 = dma.done %s237, 4096
        $region36: #{tpu_custom_call.1} parent=31 // pred_fallthru
          _
        // Predicated region
        $region37: #{tpu_custom_call.1} parent=31 // pred_check
          %p245 = pneg %p100
        $region38: #{tpu_custom_call.1} parent=31 // pred_check_branch
          %247 = sbr.rel (%p245) target = $region40
        $region39: #{tpu_custom_call.1} parent=31 // pred_region
          %248 = dma.done [#allocation6], 256
        $region40: #{tpu_custom_call.1} parent=31 // pred_fallthru
          _
        // Predicated region
        $region41: #{tpu_custom_call.1} parent=31 // pred_check
          %p249 = pneg %p126
        $region42: #{tpu_custom_call.1} parent=31 // pred_check_branch
          %251 = sbr.rel (%p249) target = $region44
        $region43: #{tpu_custom_call.1} parent=31 // pred_region
          %252 = dma.done [#allocation6], 16
        $region44: #{tpu_custom_call.1} parent=31 // pred_fallthru
          _
        %s253 = sand.u32 %s59, 1
        %s254 = scalar_lea.sflag [#allocation3], %s253
        %s255 = sand.u32 %s59, 1
        %s256 = smul.addr %s255, 256
        %s257 = scalar_lea.vmem [#allocation2], %s256
        %p258 = pneg %p72
        %p259 = pneg %p69
        %p260 = pneg %p100
        %p261 = pneg %p97
        %p262 = pneg %p126
        %p263 = pneg %p123
        %p264 = pneg %p156
        %p265 = pneg %p153
        %s266 = sand.u32 %s143, 1
        %s267 = scalar_lea.sflag [#allocation4], %s266
        %s268 = sand.u32 %s143, 1
        %s269 = smul.addr %s268, 256
        %s270 = scalar_lea.vmem [#allocation8], %s269
        %s271 = smul.u32 64, %s28
        %s272 = smul.u32 4, %s30
        %s273 = smul.u32 64, %s28
        %v275 = vld [vmem:[%s240] sm:$0xf]
        %v276 = vld [vmem:[%s240 + $0x4] sm:$0xf]
        %v277 = vld [vmem:[%s240 + $0x8] sm:$0xf]
        %v278 = vld [vmem:[%s240 + $0xc] sm:$0xf]
        %v279 = vld [vmem:[%s240 + $0x10] sm:$0xf]
        %v280 = vld [vmem:[%s240 + $0x14] sm:$0xf]
        %v281 = vld [vmem:[%s240 + $0x18] sm:$0xf]
        %v282 = vld [vmem:[%s240 + $0x1c] sm:$0xf]
        %v283 = vld [vmem:[%s240 + $0x20] sm:$0xf]
        %v284 = vld [vmem:[%s240 + $0x24] sm:$0xf]
        %v285 = vld [vmem:[%s240 + $0x28] sm:$0xf]
        %v286 = vld [vmem:[%s240 + $0x2c] sm:$0xf]
        %v287 = vld [vmem:[%s240 + $0x30] sm:$0xf]
        %v288 = vld [vmem:[%s240 + $0x34] sm:$0xf]
        %v289 = vld [vmem:[%s240 + $0x38] sm:$0xf]
        %v290 = vld [vmem:[%s240 + $0x3c] sm:$0xf]
        %v291 = vld [vmem:[%s240 + $0x40] sm:$0xf]
        %v292 = vld [vmem:[%s240 + $0x44] sm:$0xf]
        %v293 = vld [vmem:[%s240 + $0x48] sm:$0xf]
        %v294 = vld [vmem:[%s240 + $0x4c] sm:$0xf]
        %v295 = vld [vmem:[%s240 + $0x50] sm:$0xf]
        %v296 = vld [vmem:[%s240 + $0x54] sm:$0xf]
        %v297 = vld [vmem:[%s240 + $0x58] sm:$0xf]
        %v298 = vld [vmem:[%s240 + $0x5c] sm:$0xf]
        %v299 = vld [vmem:[%s240 + $0x60] sm:$0xf]
        %v300 = vld [vmem:[%s240 + $0x64] sm:$0xf]
        %v301 = vld [vmem:[%s240 + $0x68] sm:$0xf]
        %v302 = vld [vmem:[%s240 + $0x6c] sm:$0xf]
        %v303 = vld [vmem:[%s240 + $0x70] sm:$0xf]
        %v304 = vld [vmem:[%s240 + $0x74] sm:$0xf]
        %v305 = vld [vmem:[%s240 + $0x78] sm:$0xf]
        %v306 = vld [vmem:[%s240 + $0x7c] sm:$0xf]
        %v307 = vld [vmem:[%s240 + $0x80] sm:$0xf]
        %v308 = vld [vmem:[%s240 + $0x84] sm:$0xf]
        %v309 = vld [vmem:[%s240 + $0x88] sm:$0xf]
        %v310 = vld [vmem:[%s240 + $0x8c] sm:$0xf]
        %v311 = vld [vmem:[%s240 + $0x90] sm:$0xf]
        %v312 = vld [vmem:[%s240 + $0x94] sm:$0xf]
        %v313 = vld [vmem:[%s240 + $0x98] sm:$0xf]
        %v314 = vld [vmem:[%s240 + $0x9c] sm:$0xf]
        %v315 = vld [vmem:[%s240 + $0xa0] sm:$0xf]
        %v316 = vld [vmem:[%s240 + $0xa4] sm:$0xf]
        %v317 = vld [vmem:[%s240 + $0xa8] sm:$0xf]
        %v318 = vld [vmem:[%s240 + $0xac] sm:$0xf]
        %v319 = vld [vmem:[%s240 + $0xb0] sm:$0xf]
        %v320 = vld [vmem:[%s240 + $0xb4] sm:$0xf]
        %v321 = vld [vmem:[%s240 + $0xb8] sm:$0xf]
        %v322 = vld [vmem:[%s240 + $0xbc] sm:$0xf]
        %v323 = vld [vmem:[%s240 + $0xc0] sm:$0xf]
        %v324 = vld [vmem:[%s240 + $0xc4] sm:$0xf]
        %v325 = vld [vmem:[%s240 + $0xc8] sm:$0xf]
        %v326 = vld [vmem:[%s240 + $0xcc] sm:$0xf]
        %v327 = vld [vmem:[%s240 + $0xd0] sm:$0xf]
        %v328 = vld [vmem:[%s240 + $0xd4] sm:$0xf]
        %v329 = vld [vmem:[%s240 + $0xd8] sm:$0xf]
        %v330 = vld [vmem:[%s240 + $0xdc] sm:$0xf]
        %v331 = vld [vmem:[%s240 + $0xe0] sm:$0xf]
        %v332 = vld [vmem:[%s240 + $0xe4] sm:$0xf]
        %v333 = vld [vmem:[%s240 + $0xe8] sm:$0xf]
        %v334 = vld [vmem:[%s240 + $0xec] sm:$0xf]
        %v335 = vld [vmem:[%s240 + $0xf0] sm:$0xf]
        %v336 = vld [vmem:[%s240 + $0xf4] sm:$0xf]
        %v337 = vld [vmem:[%s240 + $0xf8] sm:$0xf]
        %v338 = vld [vmem:[%s240 + $0xfc] sm:$0xf]
        %v339 = vld [vmem:[#allocation5] sm:$0xf]
        %v340 = vld [vmem:[#allocation5 + $0x4] sm:$0xf]
        %v341 = vld [vmem:[#allocation5 + $0x8] sm:$0xf]
        %v342 = vld [vmem:[#allocation5 + $0xc] sm:$0x3]
        %v343 = vld [vmem:[#allocation7] sm:$0x1]
        %v345 = vlaneseq
        %v346 = vshrl.u32 %v345, 7
        %v347 = vsub.s32 0, %v346
        %v348 = vrot.slane %v343, %v347
        %v414 = vunpack.c.l.b16 %v275
        %v415 = vunpack.c.l.b16 %v276
        %v416 = vunpack.c.l.b16 %v277
        %v417 = vunpack.c.l.b16 %v278
        %v418 = vunpack.c.l.b16 %v279
        %v419 = vunpack.c.l.b16 %v280
        %v420 = vunpack.c.l.b16 %v281
        %v421 = vunpack.c.l.b16 %v282
        %v422 = vunpack.c.l.b16 %v283
        %v423 = vunpack.c.l.b16 %v284
        %v424 = vunpack.c.l.b16 %v285
        %v425 = vunpack.c.l.b16 %v286
        %v426 = vunpack.c.l.b16 %v287
        %v427 = vunpack.c.l.b16 %v288
        %v428 = vunpack.c.l.b16 %v289
        %v429 = vunpack.c.l.b16 %v290
        %v430 = vunpack.c.l.b16 %v291
        %v431 = vunpack.c.l.b16 %v292
        %v432 = vunpack.c.l.b16 %v293
        %v433 = vunpack.c.l.b16 %v294
        %v434 = vunpack.c.l.b16 %v295
        %v435 = vunpack.c.l.b16 %v296
        %v436 = vunpack.c.l.b16 %v297
        %v437 = vunpack.c.l.b16 %v298
        %v438 = vunpack.c.l.b16 %v299
        %v439 = vunpack.c.l.b16 %v300
        %v440 = vunpack.c.l.b16 %v301
        %v441 = vunpack.c.l.b16 %v302
        %v442 = vunpack.c.l.b16 %v303
        %v443 = vunpack.c.l.b16 %v304
        %v444 = vunpack.c.l.b16 %v305
        %v445 = vunpack.c.l.b16 %v306
        %v446 = vunpack.c.l.b16 %v307
        %v447 = vunpack.c.l.b16 %v308
        %v448 = vunpack.c.l.b16 %v309
        %v449 = vunpack.c.l.b16 %v310
        %v450 = vunpack.c.l.b16 %v311
        %v451 = vunpack.c.l.b16 %v312
        %v452 = vunpack.c.l.b16 %v313
        %v453 = vunpack.c.l.b16 %v314
        %v454 = vunpack.c.l.b16 %v315
        %v455 = vunpack.c.l.b16 %v316
        %v456 = vunpack.c.l.b16 %v317
        %v457 = vunpack.c.l.b16 %v318
        %v458 = vunpack.c.l.b16 %v319
        %v459 = vunpack.c.l.b16 %v320
        %v460 = vunpack.c.l.b16 %v321
        %v461 = vunpack.c.l.b16 %v322
        %v462 = vunpack.c.l.b16 %v323
        %v463 = vunpack.c.l.b16 %v324
        %v464 = vunpack.c.l.b16 %v325
        %v465 = vunpack.c.l.b16 %v326
        %v466 = vunpack.c.l.b16 %v327
        %v467 = vunpack.c.l.b16 %v328
        %v468 = vunpack.c.l.b16 %v329
        %v469 = vunpack.c.l.b16 %v330
        %v470 = vunpack.c.l.b16 %v331
        %v471 = vunpack.c.l.b16 %v332
        %v472 = vunpack.c.l.b16 %v333
        %v473 = vunpack.c.l.b16 %v334
        %v474 = vunpack.c.l.b16 %v335
        %v475 = vunpack.c.l.b16 %v336
        %v476 = vunpack.c.l.b16 %v337
        %v477 = vunpack.c.l.b16 %v338
        %v478 = vpack.c.b16 %v415, %v414
        %v479 = vpack.c.b16 %v417, %v416
        %v480 = vpack.c.b16 %v419, %v418
        %v481 = vpack.c.b16 %v421, %v420
        %v482 = vpack.c.b16 %v423, %v422
        %v483 = vpack.c.b16 %v425, %v424
        %v484 = vpack.c.b16 %v427, %v426
        %v485 = vpack.c.b16 %v429, %v428
        %v486 = vpack.c.b16 %v431, %v430
        %v487 = vpack.c.b16 %v433, %v432
        %v488 = vpack.c.b16 %v435, %v434
        %v489 = vpack.c.b16 %v437, %v436
        %v490 = vpack.c.b16 %v439, %v438
        %v491 = vpack.c.b16 %v441, %v440
        %v492 = vpack.c.b16 %v443, %v442
        %v493 = vpack.c.b16 %v445, %v444
        %v494 = vpack.c.b16 %v447, %v446
        %v495 = vpack.c.b16 %v449, %v448
        %v496 = vpack.c.b16 %v451, %v450
        %v497 = vpack.c.b16 %v453, %v452
        %v498 = vpack.c.b16 %v455, %v454
        %v499 = vpack.c.b16 %v457, %v456
        %v500 = vpack.c.b16 %v459, %v458
        %v501 = vpack.c.b16 %v461, %v460
        %v502 = vpack.c.b16 %v463, %v462
        %v503 = vpack.c.b16 %v465, %v464
        %v504 = vpack.c.b16 %v467, %v466
        %v505 = vpack.c.b16 %v469, %v468
        %v506 = vpack.c.b16 %v471, %v470
        %v507 = vpack.c.b16 %v473, %v472
        %v508 = vpack.c.b16 %v475, %v474
        %v509 = vpack.c.b16 %v477, %v476
        %v514 = vunpack.c.l.b16 %v339
        %v515 = vunpack.c.l.b16 %v340
        %v516 = vunpack.c.l.b16 %v341
        %v517 = vunpack.c.l.b16 %v342
        %v518 = vpack.c.b16 %v515, %v514
        %v519 = vpack.c.b16 %v517, %v516
        %vm521 = vcmask 220160
        %v523 = vsel %vm521, %v478, 0
        %v526 = vsel %vm521, %v479, 0
        %v529 = vsel %vm521, %v480, 0
        %v532 = vsel %vm521, %v481, 0
        %v535 = vsel %vm521, %v482, 0
        %v538 = vsel %vm521, %v483, 0
        %v541 = vsel %vm521, %v484, 0
        %v544 = vsel %vm521, %v485, 0
        %v547 = vsel %vm521, %v486, 0
        %v550 = vsel %vm521, %v487, 0
        %v553 = vsel %vm521, %v488, 0
        %v556 = vsel %vm521, %v489, 0
        %v559 = vsel %vm521, %v490, 0
        %v562 = vsel %vm521, %v491, 0
        %v565 = vsel %vm521, %v492, 0
        %v568 = vsel %vm521, %v493, 0
        %v571 = vsel %vm521, %v494, 0
        %v574 = vsel %vm521, %v495, 0
        %v577 = vsel %vm521, %v496, 0
        %v580 = vsel %vm521, %v497, 0
        %v583 = vsel %vm521, %v498, 0
        %v586 = vsel %vm521, %v499, 0
        %v589 = vsel %vm521, %v500, 0
        %v592 = vsel %vm521, %v501, 0
        %v595 = vsel %vm521, %v502, 0
        %v598 = vsel %vm521, %v503, 0
        %v601 = vsel %vm521, %v504, 0
        %v604 = vsel %vm521, %v505, 0
        %v607 = vsel %vm521, %v506, 0
        %v610 = vsel %vm521, %v507, 0
        %v613 = vsel %vm521, %v508, 0
        %v616 = vsel %vm521, %v509, 0
        %vm618 = vcmask 1044480
        %vm619 = vcmask 1045504
        %v620 = vsel %vm618, 4294967295, 65535
        %v621 = vsel %vm619, %v620, 0
        %v623 = vand.u32 %v519, %v621
        %625 = vmatprep.subr.bf16.mxu0 0
        %626 = vmatpush1.bf16.msra.mxu0 %v518
        %627 = vmatprep.subr.bf16.mxu0 0
        %628 = vmatpush1.bf16.msra.mxu0 %v623
        %629 = vmatprep.subr.bf16.mxu0 0
        %630 = vmatpush1.bf16.msra.mxu0 0
        %631 = vmatprep.subr.bf16.mxu0 0
        %632 = vmatpush1.bf16.msra.mxu0 0
        %633 = vmatprep.subr.bf16.mxu0 0
        %634 = vmatpush1.bf16.msra.mxu0 0
        %635 = vmatprep.subr.bf16.mxu0 0
        %636 = vmatpush1.bf16.msra.mxu0 0
        %637 = vmatprep.subr.bf16.mxu0 0
        %638 = vmatpush1.bf16.msra.mxu0 0
        %639 = vmatprep.subr.bf16.mxu0 0
        %640 = vmatpush1.bf16.msra.mxu0 0
        %641 = vmatprep.subr.bf16.mxu0 0
        %642 = vmatpush1.bf16.msra.mxu0 0
        %643 = vmatprep.subr.bf16.mxu0 0
        %644 = vmatpush1.bf16.msra.mxu0 0
        %645 = vmatprep.subr.bf16.mxu0 0
        %646 = vmatpush1.bf16.msra.mxu0 0
        %647 = vmatprep.subr.bf16.mxu0 0
        %648 = vmatpush1.bf16.msra.mxu0 0
        %649 = vmatprep.subr.bf16.mxu0 0
        %650 = vmatpush1.bf16.msra.mxu0 0
        %651 = vmatprep.subr.bf16.mxu0 0
        %652 = vmatpush1.bf16.msra.mxu0 0
        %653 = vmatprep.subr.bf16.mxu0 0
        %654 = vmatpush1.bf16.msra.mxu0 0
        %655 = vmatprep.subr.bf16.mxu0 0
        %656 = vmatpush1.bf16.msra.mxu0 0
        %657 = vmatprep.mubr.bf16.mxu0 0
        %658 = vmatmul.mubr.bf16.gmra.mrb[0].mxu0 %v523
        %v659 = vpop.f32.mrb[0].mxu0
        %v660 = vadd.f32 %v348, %v659
        %v661 = vpop.f32.mrb[0].mxu0
        %v662 = vpop.f32.mrb[0].mxu0
        %v663 = vadd.f32 %v348, %v662
        %v664 = vpop.f32.mrb[0].mxu0
        %665 = vmatprep.mubr.bf16.mxu0 0
        %666 = vmatmul.mubr.bf16.gmra.mrb[0].mxu0 %v526
        %v667 = vpop.f32.mrb[0].mxu0
        %v668 = vadd.f32 %v348, %v667
        %v669 = vpop.f32.mrb[0].mxu0
        %v670 = vpop.f32.mrb[0].mxu0
        %v671 = vadd.f32 %v348, %v670
        %v672 = vpop.f32.mrb[0].mxu0
        %673 = vmatprep.mubr.bf16.mxu0 0
        %674 = vmatmul.mubr.bf16.gmra.mrb[0].mxu0 %v529
        %v675 = vpop.f32.mrb[0].mxu0
        %v676 = vadd.f32 %v348, %v675
        %v677 = vpop.f32.mrb[0].mxu0
        %v678 = vpop.f32.mrb[0].mxu0
        %v679 = vadd.f32 %v348, %v678
        %v680 = vpop.f32.mrb[0].mxu0
        %681 = vmatprep.mubr.bf16.mxu0 0
        %682 = vmatmul.mubr.bf16.gmra.mrb[0].mxu0 %v532
        %v683 = vpop.f32.mrb[0].mxu0
        %v684 = vadd.f32 %v348, %v683
        %v685 = vpop.f32.mrb[0].mxu0
        %v686 = vpop.f32.mrb[0].mxu0
        %v687 = vadd.f32 %v348, %v686
        %v688 = vpop.f32.mrb[0].mxu0
        %689 = vmatprep.mubr.bf16.mxu0 0
        %690 = vmatmul.mubr.bf16.gmra.mrb[0].mxu0 %v535
        %v691 = vpop.f32.mrb[0].mxu0
        %v692 = vadd.f32 %v348, %v691
        %v693 = vpop.f32.mrb[0].mxu0
        %v694 = vpop.f32.mrb[0].mxu0
        %v695 = vadd.f32 %v348, %v694
        %v696 = vpop.f32.mrb[0].mxu0
        %697 = vmatprep.mubr.bf16.mxu0 0
        %698 = vmatmul.mubr.bf16.gmra.mrb[0].mxu0 %v538
        %v699 = vpop.f32.mrb[0].mxu0
        %v700 = vadd.f32 %v348, %v699
        %v701 = vpop.f32.mrb[0].mxu0
        %v702 = vpop.f32.mrb[0].mxu0
        %v703 = vadd.f32 %v348, %v702
        %v704 = vpop.f32.mrb[0].mxu0
        %705 = vmatprep.mubr.bf16.mxu0 0
        %706 = vmatmul.mubr.bf16.gmra.mrb[0].mxu0 %v541
        %v707 = vpop.f32.mrb[0].mxu0
        %v708 = vadd.f32 %v348, %v707
        %v709 = vpop.f32.mrb[0].mxu0
        %v710 = vpop.f32.mrb[0].mxu0
        %v711 = vadd.f32 %v348, %v710
        %v712 = vpop.f32.mrb[0].mxu0
        %713 = vmatprep.mubr.bf16.mxu0 0
        %714 = vmatmul.mubr.bf16.gmra.mrb[0].mxu0 %v544
        %v715 = vpop.f32.mrb[0].mxu0
        %v716 = vadd.f32 %v348, %v715
        %v717 = vpop.f32.mrb[0].mxu0
        %v718 = vpop.f32.mrb[0].mxu0
        %v719 = vadd.f32 %v348, %v718
        %v720 = vpop.f32.mrb[0].mxu0
        %721 = vmatprep.mubr.bf16.mxu0 0
        %722 = vmatmul.mubr.bf16.gmra.mrb[0].mxu0 %v547
        %v723 = vpop.f32.mrb[0].mxu0
        %v724 = vadd.f32 %v348, %v723
        %v725 = vpop.f32.mrb[0].mxu0
        %v726 = vpop.f32.mrb[0].mxu0
        %v727 = vadd.f32 %v348, %v726
        %v728 = vpop.f32.mrb[0].mxu0
        %729 = vmatprep.mubr.bf16.mxu0 0
        %730 = vmatmul.mubr.bf16.gmra.mrb[0].mxu0 %v550
        %v731 = vpop.f32.mrb[0].mxu0
        %v732 = vadd.f32 %v348, %v731
        %v733 = vpop.f32.mrb[0].mxu0
        %v734 = vpop.f32.mrb[0].mxu0
        %v735 = vadd.f32 %v348, %v734
        %v736 = vpop.f32.mrb[0].mxu0
        %737 = vmatprep.mubr.bf16.mxu0 0
        %738 = vmatmul.mubr.bf16.gmra.mrb[0].mxu0 %v553
        %v739 = vpop.f32.mrb[0].mxu0
        %v740 = vadd.f32 %v348, %v739
        %v741 = vpop.f32.mrb[0].mxu0
        %v742 = vpop.f32.mrb[0].mxu0
        %v743 = vadd.f32 %v348, %v742
        %v744 = vpop.f32.mrb[0].mxu0
        %745 = vmatprep.mubr.bf16.mxu0 0
        %746 = vmatmul.mubr.bf16.gmra.mrb[0].mxu0 %v556
        %v747 = vpop.f32.mrb[0].mxu0
        %v748 = vadd.f32 %v348, %v747
        %v749 = vpop.f32.mrb[0].mxu0
        %v750 = vpop.f32.mrb[0].mxu0
        %v751 = vadd.f32 %v348, %v750
        %v752 = vpop.f32.mrb[0].mxu0
        %753 = vmatprep.mubr.bf16.mxu0 0
        %754 = vmatmul.mubr.bf16.gmra.mrb[0].mxu0 %v559
        %v755 = vpop.f32.mrb[0].mxu0
        %v756 = vadd.f32 %v348, %v755
        %v757 = vpop.f32.mrb[0].mxu0
        %v758 = vpop.f32.mrb[0].mxu0
        %v759 = vadd.f32 %v348, %v758
        %v760 = vpop.f32.mrb[0].mxu0
        %761 = vmatprep.mubr.bf16.mxu0 0
        %762 = vmatmul.mubr.bf16.gmra.mrb[0].mxu0 %v562
        %v763 = vpop.f32.mrb[0].mxu0
        %v764 = vadd.f32 %v348, %v763
        %v765 = vpop.f32.mrb[0].mxu0
        %v766 = vpop.f32.mrb[0].mxu0
        %v767 = vadd.f32 %v348, %v766
        %v768 = vpop.f32.mrb[0].mxu0
        %769 = vmatprep.mubr.bf16.mxu0 0
        %770 = vmatmul.mubr.bf16.gmra.mrb[0].mxu0 %v565
        %v771 = vpop.f32.mrb[0].mxu0
        %v772 = vadd.f32 %v348, %v771
        %v773 = vpop.f32.mrb[0].mxu0
        %v774 = vpop.f32.mrb[0].mxu0
        %v775 = vadd.f32 %v348, %v774
        %v776 = vpop.f32.mrb[0].mxu0
        %777 = vmatprep.mubr.bf16.mxu0 0
        %778 = vmatmul.mubr.bf16.gmra.mrb[0].mxu0 %v568
        %v779 = vpop.f32.mrb[0].mxu0
        %v780 = vadd.f32 %v348, %v779
        %v781 = vpop.f32.mrb[0].mxu0
        %v782 = vpop.f32.mrb[0].mxu0
        %v783 = vadd.f32 %v348, %v782
        %v784 = vpop.f32.mrb[0].mxu0
        %785 = vmatprep.mubr.bf16.mxu0 0
        %786 = vmatmul.mubr.bf16.gmra.mrb[0].mxu0 %v571
        %v787 = vpop.f32.mrb[0].mxu0
        %v788 = vadd.f32 %v348, %v787
        %v789 = vpop.f32.mrb[0].mxu0
        %v790 = vpop.f32.mrb[0].mxu0
        %v791 = vadd.f32 %v348, %v790
        %v792 = vpop.f32.mrb[0].mxu0
        %793 = vmatprep.mubr.bf16.mxu0 0
        %794 = vmatmul.mubr.bf16.gmra.mrb[0].mxu0 %v574
        %v795 = vpop.f32.mrb[0].mxu0
        %v796 = vadd.f32 %v348, %v795
        %v797 = vpop.f32.mrb[0].mxu0
        %v798 = vpop.f32.mrb[0].mxu0
        %v799 = vadd.f32 %v348, %v798
        %v800 = vpop.f32.mrb[0].mxu0
        %801 = vmatprep.mubr.bf16.mxu0 0
        %802 = vmatmul.mubr.bf16.gmra.mrb[0].mxu0 %v577
        %v803 = vpop.f32.mrb[0].mxu0
        %v804 = vadd.f32 %v348, %v803
        %v805 = vpop.f32.mrb[0].mxu0
        %v806 = vpop.f32.mrb[0].mxu0
        %v807 = vadd.f32 %v348, %v806
        %v808 = vpop.f32.mrb[0].mxu0
        %809 = vmatprep.mubr.bf16.mxu0 0
        %810 = vmatmul.mubr.bf16.gmra.mrb[0].mxu0 %v580
        %v811 = vpop.f32.mrb[0].mxu0
        %v812 = vadd.f32 %v348, %v811
        %v813 = vpop.f32.mrb[0].mxu0
        %v814 = vpop.f32.mrb[0].mxu0
        %v815 = vadd.f32 %v348, %v814
        %v816 = vpop.f32.mrb[0].mxu0
        %817 = vmatprep.mubr.bf16.mxu0 0
        %818 = vmatmul.mubr.bf16.gmra.mrb[0].mxu0 %v583
        %v819 = vpop.f32.mrb[0].mxu0
        %v820 = vadd.f32 %v348, %v819
        %v821 = vpop.f32.mrb[0].mxu0
        %v822 = vpop.f32.mrb[0].mxu0
        %v823 = vadd.f32 %v348, %v822
        %v824 = vpop.f32.mrb[0].mxu0
        %825 = vmatprep.mubr.bf16.mxu0 0
        %826 = vmatmul.mubr.bf16.gmra.mrb[0].mxu0 %v586
        %v827 = vpop.f32.mrb[0].mxu0
        %v828 = vadd.f32 %v348, %v827
        %v829 = vpop.f32.mrb[0].mxu0
        %v830 = vpop.f32.mrb[0].mxu0
        %v831 = vadd.f32 %v348, %v830
        %v832 = vpop.f32.mrb[0].mxu0
        %833 = vmatprep.mubr.bf16.mxu0 0
        %834 = vmatmul.mubr.bf16.gmra.mrb[0].mxu0 %v589
        %v835 = vpop.f32.mrb[0].mxu0
        %v836 = vadd.f32 %v348, %v835
        %v837 = vpop.f32.mrb[0].mxu0
        %v838 = vpop.f32.mrb[0].mxu0
        %v839 = vadd.f32 %v348, %v838
        %v840 = vpop.f32.mrb[0].mxu0
        %841 = vmatprep.mubr.bf16.mxu0 0
        %842 = vmatmul.mubr.bf16.gmra.mrb[0].mxu0 %v592
        %v843 = vpop.f32.mrb[0].mxu0
        %v844 = vadd.f32 %v348, %v843
        %v845 = vpop.f32.mrb[0].mxu0
        %v846 = vpop.f32.mrb[0].mxu0
        %v847 = vadd.f32 %v348, %v846
        %v848 = vpop.f32.mrb[0].mxu0
        %849 = vmatprep.mubr.bf16.mxu0 0
        %850 = vmatmul.mubr.bf16.gmra.mrb[0].mxu0 %v595
        %v851 = vpop.f32.mrb[0].mxu0
        %v852 = vadd.f32 %v348, %v851
        %v853 = vpop.f32.mrb[0].mxu0
        %v854 = vpop.f32.mrb[0].mxu0
        %v855 = vadd.f32 %v348, %v854
        %v856 = vpop.f32.mrb[0].mxu0
        %857 = vmatprep.mubr.bf16.mxu0 0
        %858 = vmatmul.mubr.bf16.gmra.mrb[0].mxu0 %v598
        %v859 = vpop.f32.mrb[0].mxu0
        %v860 = vadd.f32 %v348, %v859
        %v861 = vpop.f32.mrb[0].mxu0
        %v862 = vpop.f32.mrb[0].mxu0
        %v863 = vadd.f32 %v348, %v862
        %v864 = vpop.f32.mrb[0].mxu0
        %865 = vmatprep.mubr.bf16.mxu0 0
        %866 = vmatmul.mubr.bf16.gmra.mrb[0].mxu0 %v601
        %v867 = vpop.f32.mrb[0].mxu0
        %v868 = vadd.f32 %v348, %v867
        %v869 = vpop.f32.mrb[0].mxu0
        %v870 = vpop.f32.mrb[0].mxu0
        %v871 = vadd.f32 %v348, %v870
        %v872 = vpop.f32.mrb[0].mxu0
        %873 = vmatprep.mubr.bf16.mxu0 0
        %874 = vmatmul.mubr.bf16.gmra.mrb[0].mxu0 %v604
        %v875 = vpop.f32.mrb[0].mxu0
        %v876 = vadd.f32 %v348, %v875
        %v877 = vpop.f32.mrb[0].mxu0
        %v878 = vpop.f32.mrb[0].mxu0
        %v879 = vadd.f32 %v348, %v878
        %v880 = vpop.f32.mrb[0].mxu0
        %881 = vmatprep.mubr.bf16.mxu0 0
        %882 = vmatmul.mubr.bf16.gmra.mrb[0].mxu0 %v607
        %v883 = vpop.f32.mrb[0].mxu0
        %v884 = vadd.f32 %v348, %v883
        %v885 = vpop.f32.mrb[0].mxu0
        %v886 = vpop.f32.mrb[0].mxu0
        %v887 = vadd.f32 %v348, %v886
        %v888 = vpop.f32.mrb[0].mxu0
        %889 = vmatprep.mubr.bf16.mxu0 0
        %890 = vmatmul.mubr.bf16.gmra.mrb[0].mxu0 %v610
        %v891 = vpop.f32.mrb[0].mxu0
        %v892 = vadd.f32 %v348, %v891
        %v893 = vpop.f32.mrb[0].mxu0
        %v894 = vpop.f32.mrb[0].mxu0
        %v895 = vadd.f32 %v348, %v894
        %v896 = vpop.f32.mrb[0].mxu0
        %897 = vmatprep.mubr.bf16.mxu0 0
        %898 = vmatmul.mubr.bf16.gmra.mrb[0].mxu0 %v613
        %v899 = vpop.f32.mrb[0].mxu0
        %v900 = vadd.f32 %v348, %v899
        %v901 = vpop.f32.mrb[0].mxu0
        %v902 = vpop.f32.mrb[0].mxu0
        %v903 = vadd.f32 %v348, %v902
        %v904 = vpop.f32.mrb[0].mxu0
        %905 = vmatprep.mubr.bf16.mxu0 0
        %906 = vmatmul.mubr.bf16.gmra.mrb[0].mxu0 %v616
        %v907 = vpop.f32.mrb[0].mxu0
        %v908 = vadd.f32 %v348, %v907
        %v909 = vpop.f32.mrb[0].mxu0
        %v910 = vpop.f32.mrb[0].mxu0
        %v911 = vadd.f32 %v348, %v910
        %v912 = vpop.f32.mrb[0].mxu0
        %913 = vdwg.mxu0
        %v914 = vxor.u32 %v660, 2147483648
        %v915 = vxor.u32 %v663, 2147483648
        %v916 = vxor.u32 %v668, 2147483648
        %v917 = vxor.u32 %v671, 2147483648
        %v918 = vxor.u32 %v676, 2147483648
        %v919 = vxor.u32 %v679, 2147483648
        %v920 = vxor.u32 %v684, 2147483648
        %v921 = vxor.u32 %v687, 2147483648
        %v922 = vxor.u32 %v692, 2147483648
        %v923 = vxor.u32 %v695, 2147483648
        %v924 = vxor.u32 %v700, 2147483648
        %v925 = vxor.u32 %v703, 2147483648
        %v926 = vxor.u32 %v708, 2147483648
        %v927 = vxor.u32 %v711, 2147483648
        %v928 = vxor.u32 %v716, 2147483648
        %v929 = vxor.u32 %v719, 2147483648
        %v930 = vxor.u32 %v724, 2147483648
        %v931 = vxor.u32 %v727, 2147483648
        %v932 = vxor.u32 %v732, 2147483648
        %v933 = vxor.u32 %v735, 2147483648
        %v934 = vxor.u32 %v740, 2147483648
        %v935 = vxor.u32 %v743, 2147483648
        %v936 = vxor.u32 %v748, 2147483648
        %v937 = vxor.u32 %v751, 2147483648
        %v938 = vxor.u32 %v756, 2147483648
        %v939 = vxor.u32 %v759, 2147483648
        %v940 = vxor.u32 %v764, 2147483648
        %v941 = vxor.u32 %v767, 2147483648
        %v942 = vxor.u32 %v772, 2147483648
        %v943 = vxor.u32 %v775, 2147483648
        %v944 = vxor.u32 %v780, 2147483648
        %v945 = vxor.u32 %v783, 2147483648
        %v946 = vxor.u32 %v788, 2147483648
        %v947 = vxor.u32 %v791, 2147483648
        %v948 = vxor.u32 %v796, 2147483648
        %v949 = vxor.u32 %v799, 2147483648
        %v950 = vxor.u32 %v804, 2147483648
        %v951 = vxor.u32 %v807, 2147483648
        %v952 = vxor.u32 %v812, 2147483648
        %v953 = vxor.u32 %v815, 2147483648
        %v954 = vxor.u32 %v820, 2147483648
        %v955 = vxor.u32 %v823, 2147483648
        %v956 = vxor.u32 %v828, 2147483648
        %v957 = vxor.u32 %v831, 2147483648
        %v958 = vxor.u32 %v836, 2147483648
        %v959 = vxor.u32 %v839, 2147483648
        %v960 = vxor.u32 %v844, 2147483648
        %v961 = vxor.u32 %v847, 2147483648
        %v962 = vxor.u32 %v852, 2147483648
        %v963 = vxor.u32 %v855, 2147483648
        %v964 = vxor.u32 %v860, 2147483648
        %v965 = vxor.u32 %v863, 2147483648
        %v966 = vxor.u32 %v868, 2147483648
        %v967 = vxor.u32 %v871, 2147483648
        %v968 = vxor.u32 %v876, 2147483648
        %v969 = vxor.u32 %v879, 2147483648
        %v970 = vxor.u32 %v884, 2147483648
        %v971 = vxor.u32 %v887, 2147483648
        %v972 = vxor.u32 %v892, 2147483648
        %v973 = vxor.u32 %v895, 2147483648
        %v974 = vxor.u32 %v900, 2147483648
        %v975 = vxor.u32 %v903, 2147483648
        %v976 = vxor.u32 %v908, 2147483648
        %v977 = vxor.u32 %v911, 2147483648
        %v978 = vmul.f32 %v914, 1.442695
        %v979 = vpow.pop %v978
        %v980 = vmul.f32 %v915, 1.442695
        %v981 = vpow.pop %v980
        %v982 = vmul.f32 %v916, 1.442695
        %v983 = vpow.pop %v982
        %v984 = vmul.f32 %v917, 1.442695
        %v985 = vpow.pop %v984
        %v986 = vmul.f32 %v918, 1.442695
        %v987 = vpow.pop %v986
        %v988 = vmul.f32 %v919, 1.442695
        %v989 = vpow.pop %v988
        %v990 = vmul.f32 %v920, 1.442695
        %v991 = vpow.pop %v990
        %v992 = vmul.f32 %v921, 1.442695
        %v993 = vpow.pop %v992
        %v994 = vmul.f32 %v922, 1.442695
        %v995 = vpow.pop %v994
        %v996 = vmul.f32 %v923, 1.442695
        %v997 = vpow.pop %v996
        %v998 = vmul.f32 %v924, 1.442695
        %v999 = vpow.pop %v998
        %v1000 = vmul.f32 %v925, 1.442695
        %v1001 = vpow.pop %v1000
        %v1002 = vmul.f32 %v926, 1.442695
        %v1003 = vpow.pop %v1002
        %v1004 = vmul.f32 %v927, 1.442695
        %v1005 = vpow.pop %v1004
        %v1006 = vmul.f32 %v928, 1.442695
        %v1007 = vpow.pop %v1006
        %v1008 = vmul.f32 %v929, 1.442695
        %v1009 = vpow.pop %v1008
        %v1010 = vmul.f32 %v930, 1.442695
        %v1011 = vpow.pop %v1010
        %v1012 = vmul.f32 %v931, 1.442695
        %v1013 = vpow.pop %v1012
        %v1014 = vmul.f32 %v932, 1.442695
        %v1015 = vpow.pop %v1014
        %v1016 = vmul.f32 %v933, 1.442695
        %v1017 = vpow.pop %v1016
        %v1018 = vmul.f32 %v934, 1.442695
        %v1019 = vpow.pop %v1018
        %v1020 = vmul.f32 %v935, 1.442695
        %v1021 = vpow.pop %v1020
        %v1022 = vmul.f32 %v936, 1.442695
        %v1023 = vpow.pop %v1022
        %v1024 = vmul.f32 %v937, 1.442695
        %v1025 = vpow.pop %v1024
        %v1026 = vmul.f32 %v938, 1.442695
        %v1027 = vpow.pop %v1026
        %v1028 = vmul.f32 %v939, 1.442695
        %v1029 = vpow.pop %v1028
        %v1030 = vmul.f32 %v940, 1.442695
        %v1031 = vpow.pop %v1030
        %v1032 = vmul.f32 %v941, 1.442695
        %v1033 = vpow.pop %v1032
        %v1034 = vmul.f32 %v942, 1.442695
        %v1035 = vpow.pop %v1034
        %v1036 = vmul.f32 %v943, 1.442695
        %v1037 = vpow.pop %v1036
        %v1038 = vmul.f32 %v944, 1.442695
        %v1039 = vpow.pop %v1038
        %v1040 = vmul.f32 %v945, 1.442695
        %v1041 = vpow.pop %v1040
        %v1042 = vmul.f32 %v946, 1.442695
        %v1043 = vpow.pop %v1042
        %v1044 = vmul.f32 %v947, 1.442695
        %v1045 = vpow.pop %v1044
        %v1046 = vmul.f32 %v948, 1.442695
        %v1047 = vpow.pop %v1046
        %v1048 = vmul.f32 %v949, 1.442695
        %v1049 = vpow.pop %v1048
        %v1050 = vmul.f32 %v950, 1.442695
        %v1051 = vpow.pop %v1050
        %v1052 = vmul.f32 %v951, 1.442695
        %v1053 = vpow.pop %v1052
        %v1054 = vmul.f32 %v952, 1.442695
        %v1055 = vpow.pop %v1054
        %v1056 = vmul.f32 %v953, 1.442695
        %v1057 = vpow.pop %v1056
        %v1058 = vmul.f32 %v954, 1.442695
        %v1059 = vpow.pop %v1058
        %v1060 = vmul.f32 %v955, 1.442695
        %v1061 = vpow.pop %v1060
        %v1062 = vmul.f32 %v956, 1.442695
        %v1063 = vpow.pop %v1062
        %v1064 = vmul.f32 %v957, 1.442695
        %v1065 = vpow.pop %v1064
        %v1066 = vmul.f32 %v958, 1.442695
        %v1067 = vpow.pop %v1066
        %v1068 = vmul.f32 %v959, 1.442695
        %v1069 = vpow.pop %v1068
        %v1070 = vmul.f32 %v960, 1.442695
        %v1071 = vpow.pop %v1070
        %v1072 = vmul.f32 %v961, 1.442695
        %v1073 = vpow.pop %v1072
        %v1074 = vmul.f32 %v962, 1.442695
        %v1075 = vpow.pop %v1074
        %v1076 = vmul.f32 %v963, 1.442695
        %v1077 = vpow.pop %v1076
        %v1078 = vmul.f32 %v964, 1.442695
        %v1079 = vpow.pop %v1078
        %v1080 = vmul.f32 %v965, 1.442695
        %v1081 = vpow.pop %v1080
        %v1082 = vmul.f32 %v966, 1.442695
        %v1083 = vpow.pop %v1082
        %v1084 = vmul.f32 %v967, 1.442695
        %v1085 = vpow.pop %v1084
        %v1086 = vmul.f32 %v968, 1.442695
        %v1087 = vpow.pop %v1086
        %v1088 = vmul.f32 %v969, 1.442695
        %v1089 = vpow.pop %v1088
        %v1090 = vmul.f32 %v970, 1.442695
        %v1091 = vpow.pop %v1090
        %v1092 = vmul.f32 %v971, 1.442695
        %v1093 = vpow.pop %v1092
        %v1094 = vmul.f32 %v972, 1.442695
        %v1095 = vpow.pop %v1094
        %v1096 = vmul.f32 %v973, 1.442695
        %v1097 = vpow.pop %v1096
        %v1098 = vmul.f32 %v974, 1.442695
        %v1099 = vpow.pop %v1098
        %v1100 = vmul.f32 %v975, 1.442695
        %v1101 = vpow.pop %v1100
        %v1102 = vmul.f32 %v976, 1.442695
        %v1103 = vpow.pop %v1102
        %v1104 = vmul.f32 %v977, 1.442695
        %v1105 = vpow.pop %v1104
        %v1106 = vadd.f32 %v979, 1.0
        %v1107 = vadd.f32 %v981, 1.0
        %v1108 = vadd.f32 %v983, 1.0
        %v1109 = vadd.f32 %v985, 1.0
        %v1110 = vadd.f32 %v987, 1.0
        %v1111 = vadd.f32 %v989, 1.0
        %v1112 = vadd.f32 %v991, 1.0
        %v1113 = vadd.f32 %v993, 1.0
        %v1114 = vadd.f32 %v995, 1.0
        %v1115 = vadd.f32 %v997, 1.0
        %v1116 = vadd.f32 %v999, 1.0
        %v1117 = vadd.f32 %v1001, 1.0
        %v1118 = vadd.f32 %v1003, 1.0
        %v1119 = vadd.f32 %v1005, 1.0
        %v1120 = vadd.f32 %v1007, 1.0
        %v1121 = vadd.f32 %v1009, 1.0
        %v1122 = vadd.f32 %v1011, 1.0
        %v1123 = vadd.f32 %v1013, 1.0
        %v1124 = vadd.f32 %v1015, 1.0
        %v1125 = vadd.f32 %v1017, 1.0
        %v1126 = vadd.f32 %v1019, 1.0
        %v1127 = vadd.f32 %v1021, 1.0
        %v1128 = vadd.f32 %v1023, 1.0
        %v1129 = vadd.f32 %v1025, 1.0
        %v1130 = vadd.f32 %v1027, 1.0
        %v1131 = vadd.f32 %v1029, 1.0
        %v1132 = vadd.f32 %v1031, 1.0
        %v1133 = vadd.f32 %v1033, 1.0
        %v1134 = vadd.f32 %v1035, 1.0
        %v1135 = vadd.f32 %v1037, 1.0
        %v1136 = vadd.f32 %v1039, 1.0
        %v1137 = vadd.f32 %v1041, 1.0
        %v1138 = vadd.f32 %v1043, 1.0
        %v1139 = vadd.f32 %v1045, 1.0
        %v1140 = vadd.f32 %v1047, 1.0
        %v1141 = vadd.f32 %v1049, 1.0
        %v1142 = vadd.f32 %v1051, 1.0
        %v1143 = vadd.f32 %v1053, 1.0
        %v1144 = vadd.f32 %v1055, 1.0
        %v1145 = vadd.f32 %v1057, 1.0
        %v1146 = vadd.f32 %v1059, 1.0
        %v1147 = vadd.f32 %v1061, 1.0
        %v1148 = vadd.f32 %v1063, 1.0
        %v1149 = vadd.f32 %v1065, 1.0
        %v1150 = vadd.f32 %v1067, 1.0
        %v1151 = vadd.f32 %v1069, 1.0
        %v1152 = vadd.f32 %v1071, 1.0
        %v1153 = vadd.f32 %v1073, 1.0
        %v1154 = vadd.f32 %v1075, 1.0
        %v1155 = vadd.f32 %v1077, 1.0
        %v1156 = vadd.f32 %v1079, 1.0
        %v1157 = vadd.f32 %v1081, 1.0
        %v1158 = vadd.f32 %v1083, 1.0
        %v1159 = vadd.f32 %v1085, 1.0
        %v1160 = vadd.f32 %v1087, 1.0
        %v1161 = vadd.f32 %v1089, 1.0
        %v1162 = vadd.f32 %v1091, 1.0
        %v1163 = vadd.f32 %v1093, 1.0
        %v1164 = vadd.f32 %v1095, 1.0
        %v1165 = vadd.f32 %v1097, 1.0
        %v1166 = vadd.f32 %v1099, 1.0
        %v1167 = vadd.f32 %v1101, 1.0
        %v1168 = vadd.f32 %v1103, 1.0
        %v1169 = vadd.f32 %v1105, 1.0
        %v1170 = vrcp.pop %v1106
        %v1171 = vmul.f32 1.0, %v1170
        %v1172 = vrcp.pop %v1107
        %v1173 = vmul.f32 1.0, %v1172
        %v1174 = vrcp.pop %v1108
        %v1175 = vmul.f32 1.0, %v1174
        %v1176 = vrcp.pop %v1109
        %v1177 = vmul.f32 1.0, %v1176
        %v1178 = vrcp.pop %v1110
        %v1179 = vmul.f32 1.0, %v1178
        %v1180 = vrcp.pop %v1111
        %v1181 = vmul.f32 1.0, %v1180
        %v1182 = vrcp.pop %v1112
        %v1183 = vmul.f32 1.0, %v1182
        %v1184 = vrcp.pop %v1113
        %v1185 = vmul.f32 1.0, %v1184
        %v1186 = vrcp.pop %v1114
        %v1187 = vmul.f32 1.0, %v1186
        %v1188 = vrcp.pop %v1115
        %v1189 = vmul.f32 1.0, %v1188
        %v1190 = vrcp.pop %v1116
        %v1191 = vmul.f32 1.0, %v1190
        %v1192 = vrcp.pop %v1117
        %v1193 = vmul.f32 1.0, %v1192
        %v1194 = vrcp.pop %v1118
        %v1195 = vmul.f32 1.0, %v1194
        %v1196 = vrcp.pop %v1119
        %v1197 = vmul.f32 1.0, %v1196
        %v1198 = vrcp.pop %v1120
        %v1199 = vmul.f32 1.0, %v1198
        %v1200 = vrcp.pop %v1121
        %v1201 = vmul.f32 1.0, %v1200
        %v1202 = vrcp.pop %v1122
        %v1203 = vmul.f32 1.0, %v1202
        %v1204 = vrcp.pop %v1123
        %v1205 = vmul.f32 1.0, %v1204
        %v1206 = vrcp.pop %v1124
        %v1207 = vmul.f32 1.0, %v1206
        %v1208 = vrcp.pop %v1125
        %v1209 = vmul.f32 1.0, %v1208
        %v1210 = vrcp.pop %v1126
        %v1211 = vmul.f32 1.0, %v1210
        %v1212 = vrcp.pop %v1127
        %v1213 = vmul.f32 1.0, %v1212
        %v1214 = vrcp.pop %v1128
        %v1215 = vmul.f32 1.0, %v1214
        %v1216 = vrcp.pop %v1129
        %v1217 = vmul.f32 1.0, %v1216
        %v1218 = vrcp.pop %v1130
        %v1219 = vmul.f32 1.0, %v1218
        %v1220 = vrcp.pop %v1131
        %v1221 = vmul.f32 1.0, %v1220
        %v1222 = vrcp.pop %v1132
        %v1223 = vmul.f32 1.0, %v1222
        %v1224 = vrcp.pop %v1133
        %v1225 = vmul.f32 1.0, %v1224
        %v1226 = vrcp.pop %v1134
        %v1227 = vmul.f32 1.0, %v1226
        %v1228 = vrcp.pop %v1135
        %v1229 = vmul.f32 1.0, %v1228
        %v1230 = vrcp.pop %v1136
        %v1231 = vmul.f32 1.0, %v1230
        %v1232 = vrcp.pop %v1137
        %v1233 = vmul.f32 1.0, %v1232
        %v1234 = vrcp.pop %v1138
        %v1235 = vmul.f32 1.0, %v1234
        %v1236 = vrcp.pop %v1139
        %v1237 = vmul.f32 1.0, %v1236
        %v1238 = vrcp.pop %v1140
        %v1239 = vmul.f32 1.0, %v1238
        %v1240 = vrcp.pop %v1141
        %v1241 = vmul.f32 1.0, %v1240
        %v1242 = vrcp.pop %v1142
        %v1243 = vmul.f32 1.0, %v1242
        %v1244 = vrcp.pop %v1143
        %v1245 = vmul.f32 1.0, %v1244
        %v1246 = vrcp.pop %v1144
        %v1247 = vmul.f32 1.0, %v1246
        %v1248 = vrcp.pop %v1145
        %v1249 = vmul.f32 1.0, %v1248
        %v1250 = vrcp.pop %v1146
        %v1251 = vmul.f32 1.0, %v1250
        %v1252 = vrcp.pop %v1147
        %v1253 = vmul.f32 1.0, %v1252
        %v1254 = vrcp.pop %v1148
        %v1255 = vmul.f32 1.0, %v1254
        %v1256 = vrcp.pop %v1149
        %v1257 = vmul.f32 1.0, %v1256
        %v1258 = vrcp.pop %v1150
        %v1259 = vmul.f32 1.0, %v1258
        %v1260 = vrcp.pop %v1151
        %v1261 = vmul.f32 1.0, %v1260
        %v1262 = vrcp.pop %v1152
        %v1263 = vmul.f32 1.0, %v1262
        %v1264 = vrcp.pop %v1153
        %v1265 = vmul.f32 1.0, %v1264
        %v1266 = vrcp.pop %v1154
        %v1267 = vmul.f32 1.0, %v1266
        %v1268 = vrcp.pop %v1155
        %v1269 = vmul.f32 1.0, %v1268
        %v1270 = vrcp.pop %v1156
        %v1271 = vmul.f32 1.0, %v1270
        %v1272 = vrcp.pop %v1157
        %v1273 = vmul.f32 1.0, %v1272
        %v1274 = vrcp.pop %v1158
        %v1275 = vmul.f32 1.0, %v1274
        %v1276 = vrcp.pop %v1159
        %v1277 = vmul.f32 1.0, %v1276
        %v1278 = vrcp.pop %v1160
        %v1279 = vmul.f32 1.0, %v1278
        %v1280 = vrcp.pop %v1161
        %v1281 = vmul.f32 1.0, %v1280
        %v1282 = vrcp.pop %v1162
        %v1283 = vmul.f32 1.0, %v1282
        %v1284 = vrcp.pop %v1163
        %v1285 = vmul.f32 1.0, %v1284
        %v1286 = vrcp.pop %v1164
        %v1287 = vmul.f32 1.0, %v1286
        %v1288 = vrcp.pop %v1165
        %v1289 = vmul.f32 1.0, %v1288
        %v1290 = vrcp.pop %v1166
        %v1291 = vmul.f32 1.0, %v1290
        %v1292 = vrcp.pop %v1167
        %v1293 = vmul.f32 1.0, %v1292
        %v1294 = vrcp.pop %v1168
        %v1295 = vmul.f32 1.0, %v1294
        %v1296 = vrcp.pop %v1169
        %v1297 = vmul.f32 1.0, %v1296
        %v1298 = vmul.f32 %v660, %v1171
        %v1299 = vmul.f32 %v663, %v1173
        %v1300 = vmul.f32 %v668, %v1175
        %v1301 = vmul.f32 %v671, %v1177
        %v1302 = vmul.f32 %v676, %v1179
        %v1303 = vmul.f32 %v679, %v1181
        %v1304 = vmul.f32 %v684, %v1183
        %v1305 = vmul.f32 %v687, %v1185
        %v1306 = vmul.f32 %v692, %v1187
        %v1307 = vmul.f32 %v695, %v1189
        %v1308 = vmul.f32 %v700, %v1191
        %v1309 = vmul.f32 %v703, %v1193
        %v1310 = vmul.f32 %v708, %v1195
        %v1311 = vmul.f32 %v711, %v1197
        %v1312 = vmul.f32 %v716, %v1199
        %v1313 = vmul.f32 %v719, %v1201
        %v1314 = vmul.f32 %v724, %v1203
        %v1315 = vmul.f32 %v727, %v1205
        %v1316 = vmul.f32 %v732, %v1207
        %v1317 = vmul.f32 %v735, %v1209
        %v1318 = vmul.f32 %v740, %v1211
        %v1319 = vmul.f32 %v743, %v1213
        %v1320 = vmul.f32 %v748, %v1215
        %v1321 = vmul.f32 %v751, %v1217
        %v1322 = vmul.f32 %v756, %v1219
        %v1323 = vmul.f32 %v759, %v1221
        %v1324 = vmul.f32 %v764, %v1223
        %v1325 = vmul.f32 %v767, %v1225
        %v1326 = vmul.f32 %v772, %v1227
        %v1327 = vmul.f32 %v775, %v1229
        %v1328 = vmul.f32 %v780, %v1231
        %v1329 = vmul.f32 %v783, %v1233
        %v1330 = vmul.f32 %v788, %v1235
        %v1331 = vmul.f32 %v791, %v1237
        %v1332 = vmul.f32 %v796, %v1239
        %v1333 = vmul.f32 %v799, %v1241
        %v1334 = vmul.f32 %v804, %v1243
        %v1335 = vmul.f32 %v807, %v1245
        %v1336 = vmul.f32 %v812, %v1247
        %v1337 = vmul.f32 %v815, %v1249
        %v1338 = vmul.f32 %v820, %v1251
        %v1339 = vmul.f32 %v823, %v1253
        %v1340 = vmul.f32 %v828, %v1255
        %v1341 = vmul.f32 %v831, %v1257
        %v1342 = vmul.f32 %v836, %v1259
        %v1343 = vmul.f32 %v839, %v1261
        %v1344 = vmul.f32 %v844, %v1263
        %v1345 = vmul.f32 %v847, %v1265
        %v1346 = vmul.f32 %v852, %v1267
        %v1347 = vmul.f32 %v855, %v1269
        %v1348 = vmul.f32 %v860, %v1271
        %v1349 = vmul.f32 %v863, %v1273
        %v1350 = vmul.f32 %v868, %v1275
        %v1351 = vmul.f32 %v871, %v1277
        %v1352 = vmul.f32 %v876, %v1279
        %v1353 = vmul.f32 %v879, %v1281
        %v1354 = vmul.f32 %v884, %v1283
        %v1355 = vmul.f32 %v887, %v1285
        %v1356 = vmul.f32 %v892, %v1287
        %v1357 = vmul.f32 %v895, %v1289
        %v1358 = vmul.f32 %v900, %v1291
        %v1359 = vmul.f32 %v903, %v1293
        %v1360 = vmul.f32 %v908, %v1295
        %v1361 = vmul.f32 %v911, %v1297
        %v1362 = vpack.c.bf16 %v1299, %v1298
        %v1363 = vpack.c.bf16 %v1301, %v1300
        %v1364 = vpack.c.bf16 %v1303, %v1302
        %v1365 = vpack.c.bf16 %v1305, %v1304
        %v1366 = vpack.c.bf16 %v1307, %v1306
        %v1367 = vpack.c.bf16 %v1309, %v1308
        %v1368 = vpack.c.bf16 %v1311, %v1310
        %v1369 = vpack.c.bf16 %v1313, %v1312
        %v1370 = vpack.c.bf16 %v1315, %v1314
        %v1371 = vpack.c.bf16 %v1317, %v1316
        %v1372 = vpack.c.bf16 %v1319, %v1318
        %v1373 = vpack.c.bf16 %v1321, %v1320
        %v1374 = vpack.c.bf16 %v1323, %v1322
        %v1375 = vpack.c.bf16 %v1325, %v1324
        %v1376 = vpack.c.bf16 %v1327, %v1326
        %v1377 = vpack.c.bf16 %v1329, %v1328
        %v1378 = vpack.c.bf16 %v1331, %v1330
        %v1379 = vpack.c.bf16 %v1333, %v1332
        %v1380 = vpack.c.bf16 %v1335, %v1334
        %v1381 = vpack.c.bf16 %v1337, %v1336
        %v1382 = vpack.c.bf16 %v1339, %v1338
        %v1383 = vpack.c.bf16 %v1341, %v1340
        %v1384 = vpack.c.bf16 %v1343, %v1342
        %v1385 = vpack.c.bf16 %v1345, %v1344
        %v1386 = vpack.c.bf16 %v1347, %v1346
        %v1387 = vpack.c.bf16 %v1349, %v1348
        %v1388 = vpack.c.bf16 %v1351, %v1350
        %v1389 = vpack.c.bf16 %v1353, %v1352
        %v1390 = vpack.c.bf16 %v1355, %v1354
        %v1391 = vpack.c.bf16 %v1357, %v1356
        %v1392 = vpack.c.bf16 %v1359, %v1358
        %v1393 = vpack.c.bf16 %v1361, %v1360
        %v1426 = vunpack.c.l.b16 %v1362
        %v1427 = vunpack.c.h.b16 %v1362
        %v1428 = vunpack.c.l.b16 %v1363
        %v1429 = vunpack.c.h.b16 %v1363
        %v1430 = vunpack.c.l.b16 %v1364
        %v1431 = vunpack.c.h.b16 %v1364
        %v1432 = vunpack.c.l.b16 %v1365
        %v1433 = vunpack.c.h.b16 %v1365
        %v1434 = vunpack.c.l.b16 %v1366
        %v1435 = vunpack.c.h.b16 %v1366
        %v1436 = vunpack.c.l.b16 %v1367
        %v1437 = vunpack.c.h.b16 %v1367
        %v1438 = vunpack.c.l.b16 %v1368
        %v1439 = vunpack.c.h.b16 %v1368
        %v1440 = vunpack.c.l.b16 %v1369
        %v1441 = vunpack.c.h.b16 %v1369
        %v1442 = vunpack.c.l.b16 %v1370
        %v1443 = vunpack.c.h.b16 %v1370
        %v1444 = vunpack.c.l.b16 %v1371
        %v1445 = vunpack.c.h.b16 %v1371
        %v1446 = vunpack.c.l.b16 %v1372
        %v1447 = vunpack.c.h.b16 %v1372
        %v1448 = vunpack.c.l.b16 %v1373
        %v1449 = vunpack.c.h.b16 %v1373
        %v1450 = vunpack.c.l.b16 %v1374
        %v1451 = vunpack.c.h.b16 %v1374
        %v1452 = vunpack.c.l.b16 %v1375
        %v1453 = vunpack.c.h.b16 %v1375
        %v1454 = vunpack.c.l.b16 %v1376
        %v1455 = vunpack.c.h.b16 %v1376
        %v1456 = vunpack.c.l.b16 %v1377
        %v1457 = vunpack.c.h.b16 %v1377
        %v1458 = vunpack.c.l.b16 %v1378
        %v1459 = vunpack.c.h.b16 %v1378
        %v1460 = vunpack.c.l.b16 %v1379
        %v1461 = vunpack.c.h.b16 %v1379
        %v1462 = vunpack.c.l.b16 %v1380
        %v1463 = vunpack.c.h.b16 %v1380
        %v1464 = vunpack.c.l.b16 %v1381
        %v1465 = vunpack.c.h.b16 %v1381
        %v1466 = vunpack.c.l.b16 %v1382
        %v1467 = vunpack.c.h.b16 %v1382
        %v1468 = vunpack.c.l.b16 %v1383
        %v1469 = vunpack.c.h.b16 %v1383
        %v1470 = vunpack.c.l.b16 %v1384
        %v1471 = vunpack.c.h.b16 %v1384
        %v1472 = vunpack.c.l.b16 %v1385
        %v1473 = vunpack.c.h.b16 %v1385
        %v1474 = vunpack.c.l.b16 %v1386
        %v1475 = vunpack.c.h.b16 %v1386
        %v1476 = vunpack.c.l.b16 %v1387
        %v1477 = vunpack.c.h.b16 %v1387
        %v1478 = vunpack.c.l.b16 %v1388
        %v1479 = vunpack.c.h.b16 %v1388
        %v1480 = vunpack.c.l.b16 %v1389
        %v1481 = vunpack.c.h.b16 %v1389
        %v1482 = vunpack.c.l.b16 %v1390
        %v1483 = vunpack.c.h.b16 %v1390
        %v1484 = vunpack.c.l.b16 %v1391
        %v1485 = vunpack.c.h.b16 %v1391
        %v1486 = vunpack.c.l.b16 %v1392
        %v1487 = vunpack.c.h.b16 %v1392
        %v1488 = vunpack.c.l.b16 %v1393
        %v1489 = vunpack.c.h.b16 %v1393
        %v1490 = vpack.c.b16 %v1426, %v1426
        %v1491 = vpack.c.b16 %v1427, %v1427
        %v1492 = vpack.c.b16 %v1428, %v1428
        %v1493 = vpack.c.b16 %v1429, %v1429
        %v1494 = vpack.c.b16 %v1430, %v1430
        %v1495 = vpack.c.b16 %v1431, %v1431
        %v1496 = vpack.c.b16 %v1432, %v1432
        %v1497 = vpack.c.b16 %v1433, %v1433
        %v1498 = vpack.c.b16 %v1434, %v1434
        %v1499 = vpack.c.b16 %v1435, %v1435
        %v1500 = vpack.c.b16 %v1436, %v1436
        %v1501 = vpack.c.b16 %v1437, %v1437
        %v1502 = vpack.c.b16 %v1438, %v1438
        %v1503 = vpack.c.b16 %v1439, %v1439
        %v1504 = vpack.c.b16 %v1440, %v1440
        %v1505 = vpack.c.b16 %v1441, %v1441
        %v1506 = vpack.c.b16 %v1442, %v1442
        %v1507 = vpack.c.b16 %v1443, %v1443
        %v1508 = vpack.c.b16 %v1444, %v1444
        %v1509 = vpack.c.b16 %v1445, %v1445
        %v1510 = vpack.c.b16 %v1446, %v1446
        %v1511 = vpack.c.b16 %v1447, %v1447
        %v1512 = vpack.c.b16 %v1448, %v1448
        %v1513 = vpack.c.b16 %v1449, %v1449
        %v1514 = vpack.c.b16 %v1450, %v1450
        %v1515 = vpack.c.b16 %v1451, %v1451
        %v1516 = vpack.c.b16 %v1452, %v1452
        %v1517 = vpack.c.b16 %v1453, %v1453
        %v1518 = vpack.c.b16 %v1454, %v1454
        %v1519 = vpack.c.b16 %v1455, %v1455
        %v1520 = vpack.c.b16 %v1456, %v1456
        %v1521 = vpack.c.b16 %v1457, %v1457
        %v1522 = vpack.c.b16 %v1458, %v1458
        %v1523 = vpack.c.b16 %v1459, %v1459
        %v1524 = vpack.c.b16 %v1460, %v1460
        %v1525 = vpack.c.b16 %v1461, %v1461
        %v1526 = vpack.c.b16 %v1462, %v1462
        %v1527 = vpack.c.b16 %v1463, %v1463
        %v1528 = vpack.c.b16 %v1464, %v1464
        %v1529 = vpack.c.b16 %v1465, %v1465
        %v1530 = vpack.c.b16 %v1466, %v1466
        %v1531 = vpack.c.b16 %v1467, %v1467
        %v1532 = vpack.c.b16 %v1468, %v1468
        %v1533 = vpack.c.b16 %v1469, %v1469
        %v1534 = vpack.c.b16 %v1470, %v1470
        %v1535 = vpack.c.b16 %v1471, %v1471
        %v1536 = vpack.c.b16 %v1472, %v1472
        %v1537 = vpack.c.b16 %v1473, %v1473
        %v1538 = vpack.c.b16 %v1474, %v1474
        %v1539 = vpack.c.b16 %v1475, %v1475
        %v1540 = vpack.c.b16 %v1476, %v1476
        %v1541 = vpack.c.b16 %v1477, %v1477
        %v1542 = vpack.c.b16 %v1478, %v1478
        %v1543 = vpack.c.b16 %v1479, %v1479
        %v1544 = vpack.c.b16 %v1480, %v1480
        %v1545 = vpack.c.b16 %v1481, %v1481
        %v1546 = vpack.c.b16 %v1482, %v1482
        %v1547 = vpack.c.b16 %v1483, %v1483
        %v1548 = vpack.c.b16 %v1484, %v1484
        %v1549 = vpack.c.b16 %v1485, %v1485
        %v1550 = vpack.c.b16 %v1486, %v1486
        %v1551 = vpack.c.b16 %v1487, %v1487
        %v1552 = vpack.c.b16 %v1488, %v1488
        %v1553 = vpack.c.b16 %v1489, %v1489
        %vm1618 = vcmask 519168
        %1619 = vst.msk [vmem:[%s270] sm:$0xf] %vm1618, %v1490
        %1620 = vst.msk [vmem:[%s270 + $0x4] sm:$0xf] %vm1618, %v1491
        %1621 = vst.msk [vmem:[%s270 + $0x8] sm:$0xf] %vm1618, %v1492
        %1622 = vst.msk [vmem:[%s270 + $0xc] sm:$0xf] %vm1618, %v1493
        %1623 = vst.msk [vmem:[%s270 + $0x10] sm:$0xf] %vm1618, %v1494
        %1624 = vst.msk [vmem:[%s270 + $0x14] sm:$0xf] %vm1618, %v1495
        %1625 = vst.msk [vmem:[%s270 + $0x18] sm:$0xf] %vm1618, %v1496
        %1626 = vst.msk [vmem:[%s270 + $0x1c] sm:$0xf] %vm1618, %v1497
        %1627 = vst.msk [vmem:[%s270 + $0x20] sm:$0xf] %vm1618, %v1498
        %1628 = vst.msk [vmem:[%s270 + $0x24] sm:$0xf] %vm1618, %v1499
        %1629 = vst.msk [vmem:[%s270 + $0x28] sm:$0xf] %vm1618, %v1500
        %1630 = vst.msk [vmem:[%s270 + $0x2c] sm:$0xf] %vm1618, %v1501
        %1631 = vst.msk [vmem:[%s270 + $0x30] sm:$0xf] %vm1618, %v1502
        %1632 = vst.msk [vmem:[%s270 + $0x34] sm:$0xf] %vm1618, %v1503
        %1633 = vst.msk [vmem:[%s270 + $0x38] sm:$0xf] %vm1618, %v1504
        %1634 = vst.msk [vmem:[%s270 + $0x3c] sm:$0xf] %vm1618, %v1505
        %1635 = vst.msk [vmem:[%s270 + $0x40] sm:$0xf] %vm1618, %v1506
        %1636 = vst.msk [vmem:[%s270 + $0x44] sm:$0xf] %vm1618, %v1507
        %1637 = vst.msk [vmem:[%s270 + $0x48] sm:$0xf] %vm1618, %v1508
        %1638 = vst.msk [vmem:[%s270 + $0x4c] sm:$0xf] %vm1618, %v1509
        %1639 = vst.msk [vmem:[%s270 + $0x50] sm:$0xf] %vm1618, %v1510
        %1640 = vst.msk [vmem:[%s270 + $0x54] sm:$0xf] %vm1618, %v1511
        %1641 = vst.msk [vmem:[%s270 + $0x58] sm:$0xf] %vm1618, %v1512
        %1642 = vst.msk [vmem:[%s270 + $0x5c] sm:$0xf] %vm1618, %v1513
        %1643 = vst.msk [vmem:[%s270 + $0x60] sm:$0xf] %vm1618, %v1514
        %1644 = vst.msk [vmem:[%s270 + $0x64] sm:$0xf] %vm1618, %v1515
        %1645 = vst.msk [vmem:[%s270 + $0x68] sm:$0xf] %vm1618, %v1516
        %1646 = vst.msk [vmem:[%s270 + $0x6c] sm:$0xf] %vm1618, %v1517
        %1647 = vst.msk [vmem:[%s270 + $0x70] sm:$0xf] %vm1618, %v1518
        %1648 = vst.msk [vmem:[%s270 + $0x74] sm:$0xf] %vm1618, %v1519
        %1649 = vst.msk [vmem:[%s270 + $0x78] sm:$0xf] %vm1618, %v1520
        %1650 = vst.msk [vmem:[%s270 + $0x7c] sm:$0xf] %vm1618, %v1521
        %1651 = vst.msk [vmem:[%s270 + $0x80] sm:$0xf] %vm1618, %v1522
        %1652 = vst.msk [vmem:[%s270 + $0x84] sm:$0xf] %vm1618, %v1523
        %1653 = vst.msk [vmem:[%s270 + $0x88] sm:$0xf] %vm1618, %v1524
        %1654 = vst.msk [vmem:[%s270 + $0x8c] sm:$0xf] %vm1618, %v1525
        %1655 = vst.msk [vmem:[%s270 + $0x90] sm:$0xf] %vm1618, %v1526
        %1656 = vst.msk [vmem:[%s270 + $0x94] sm:$0xf] %vm1618, %v1527
        %1657 = vst.msk [vmem:[%s270 + $0x98] sm:$0xf] %vm1618, %v1528
        %1658 = vst.msk [vmem:[%s270 + $0x9c] sm:$0xf] %vm1618, %v1529
        %1659 = vst.msk [vmem:[%s270 + $0xa0] sm:$0xf] %vm1618, %v1530
        %1660 = vst.msk [vmem:[%s270 + $0xa4] sm:$0xf] %vm1618, %v1531
        %1661 = vst.msk [vmem:[%s270 + $0xa8] sm:$0xf] %vm1618, %v1532
        %1662 = vst.msk [vmem:[%s270 + $0xac] sm:$0xf] %vm1618, %v1533
        %1663 = vst.msk [vmem:[%s270 + $0xb0] sm:$0xf] %vm1618, %v1534
        %1664 = vst.msk [vmem:[%s270 + $0xb4] sm:$0xf] %vm1618, %v1535
        %1665 = vst.msk [vmem:[%s270 + $0xb8] sm:$0xf] %vm1618, %v1536
        %1666 = vst.msk [vmem:[%s270 + $0xbc] sm:$0xf] %vm1618, %v1537
        %1667 = vst.msk [vmem:[%s270 + $0xc0] sm:$0xf] %vm1618, %v1538
        %1668 = vst.msk [vmem:[%s270 + $0xc4] sm:$0xf] %vm1618, %v1539
        %1669 = vst.msk [vmem:[%s270 + $0xc8] sm:$0xf] %vm1618, %v1540
        %1670 = vst.msk [vmem:[%s270 + $0xcc] sm:$0xf] %vm1618, %v1541
        %1671 = vst.msk [vmem:[%s270 + $0xd0] sm:$0xf] %vm1618, %v1542
        %1672 = vst.msk [vmem:[%s270 + $0xd4] sm:$0xf] %vm1618, %v1543
        %1673 = vst.msk [vmem:[%s270 + $0xd8] sm:$0xf] %vm1618, %v1544
        %1674 = vst.msk [vmem:[%s270 + $0xdc] sm:$0xf] %vm1618, %v1545
        %1675 = vst.msk [vmem:[%s270 + $0xe0] sm:$0xf] %vm1618, %v1546
        %1676 = vst.msk [vmem:[%s270 + $0xe4] sm:$0xf] %vm1618, %v1547
        %1677 = vst.msk [vmem:[%s270 + $0xe8] sm:$0xf] %vm1618, %v1548
        %1678 = vst.msk [vmem:[%s270 + $0xec] sm:$0xf] %vm1618, %v1549
        %1679 = vst.msk [vmem:[%s270 + $0xf0] sm:$0xf] %vm1618, %v1550
        %1680 = vst.msk [vmem:[%s270 + $0xf4] sm:$0xf] %vm1618, %v1551
        %1681 = vst.msk [vmem:[%s270 + $0xf8] sm:$0xf] %vm1618, %v1552
        %1682 = vst.msk [vmem:[%s270 + $0xfc] sm:$0xf] %vm1618, %v1553
        %s1683 = sand.u32 %s143, 1
        %s1684 = scalar_lea.sflag [#allocation4], %s1683
        %s1685 = sand.u32 %s143, 1
        %s1686 = smul.addr %s1685, 256
        %s1687 = scalar_lea.vmem [#allocation8], %s1686
        // Predicated region
        $region45: #{tpu_custom_call.1} parent=31 // pred_check
          %p1688 = pneg %p153
        $region46: #{tpu_custom_call.1} parent=31 // pred_check_branch
          %1690 = sbr.rel (%p1688) target = $region48
        $region47: #{tpu_custom_call.1} parent=31 // pred_region
          %s1691 = smul.u32 64, %s28
          %s1693 = ssub.s32 4096, 4096
          %1694 = vsyncadd %s1684, %s1693
          %s1695 = sadd.s32 %s29, %s1691
          %s1696 = smul.addr %s27, 128
          %s1697 = sadd.s32 %s1695, %s1696
          %s1698 = smul.addr %s1697, 64
          %s1699 = scalar_lea.hbm %s3, %s1698
          %s1700 = sshll.u32 %s1687, 4
          %s1701 = int_to_ptr.vmem [resolvable:$true] %s1700
          %1706 = dma.vmem_to_hbm [thread:$0]  %s1701, 4096, %s1699, %s1684, 64, 64, 4
        $region48: #{tpu_custom_call.1} parent=31 // pred_fallthru
          _
      $region32: #{tpu_custom_call.1} parent=5 // pred_fallthru
        _
      %p1707 = scmp.le.s32.totalorder 2, %s16
      // Predicated region
      $region49: #{tpu_custom_call.1} parent=5 // pred_check
        %p1708 = pneg %p1707
      $region50: #{tpu_custom_call.1} parent=5 // pred_check_branch
        %1710 = sbr.rel (%p1708) target = $region52
      $region51: #{tpu_custom_call.1} parent=5 // pred_region
        %s1711 = ssub.s32 %s16, 2
        // Predicated region
        $region53: #{tpu_custom_call.1} parent=51 // pred_check
          %p1712 = pneg %p159
        $region54: #{tpu_custom_call.1} parent=51 // pred_check_branch
          %1714 = sbr.rel (%p1712) target = $region56
        $region55: #{tpu_custom_call.1} parent=51 // pred_region
          %s1715 = sand.u32 %s144, 1
          %s1716 = scalar_lea.sflag [#allocation4], %s1715
          %s1717 = sand.u32 %s144, 1
          %s1718 = smul.addr %s1717, 256
          %s1719 = scalar_lea.vmem [#allocation8], %s1718
          %1720 = dma.done %s1716, 4096
        $region56: #{tpu_custom_call.1} parent=51 // pred_fallthru
          _
      $region52: #{tpu_custom_call.1} parent=5 // pred_fallthru
        _
    $region6: #{tpu_custom_call.1} parent=1 // loop_footer
      %s20 = sadd.s32 1, %s16
    $region7: #{tpu_custom_call.1} parent=1 // loop_footer_branch
      %15 = sbr.rel target = $region3
    $region8: #{tpu_custom_call.1} parent=1 // loop_exit
      _
    %1721 = vsyncpa [#allocation3], 1
    %s1722 = scalar_lea.sflag [#allocation3], 1
    %1723 = vsyncpa %s1722, 1
    %1724 = vsyncpa [#allocation6], 1
    %1725 = vsyncpa [#allocation4], 1
    %s1726 = scalar_lea.sflag [#allocation4], 1
    %1727 = vsyncpa %s1726, 1

</llo_original>
